<compile_context>
chip_gen: v5e
topology: v5e:2x2
jax: 0.10.0
libtpu: 0.0.40
codegen_flags: <defaults>
</compile_context>

<pallas_src>
import numpy as np
import jax
import jax.numpy as jnp
from jax.experimental import pallas as pl
from jax.experimental.pallas import tpu as pltpu


LANE = 128
_VMEM_LIMIT = 32 * 1024 * 1024  # safe on v5e (16 MiB default) and v7x (64 MiB physical)


def _round_up(x, m):
    return ((x + m - 1) // m) * m


# ----------------------------------------------------------------------------
# Kernel 1: normalize + VAE encode + reparameterize + cosine row-normalization
# ----------------------------------------------------------------------------
def vae_encode_kernel(x_ref, w1_ref, b1_ref, w21_ref, b21_ref,
                      w22_ref, b22_ref, eps_ref, z_ref, zn_ref):
    x = x_ref[...]
    # rating_matrix[rating_matrix == 0] = nan ; rating_matrix /= nanmax(rating_matrix)
    x_nan = jnp.where(x == 0.0, jnp.float32(jnp.nan), x)
    finite = jnp.where(jnp.isnan(x_nan), jnp.float32(-jnp.inf), x_nan)
    nanmax = jnp.max(finite)
    # TODO(synk): an all-zero / all-NaN rating matrix gives nanmax == -inf and
    # silently zeros everything, whereas torch.nanmax would raise.
    xn = x_nan * (1.0 / nanmax)            # one scalar reciprocal + broadcast mul

    # MXU feeds in bf16 (f32 accumulate); elementwise stays f32 (v5e: no bf16 VPU).
    xn_bf = xn.astype(jnp.bfloat16)
    h1 = jnp.maximum(
        jnp.dot(xn_bf, w1_ref[...], preferred_element_type=jnp.float32) + b1_ref[...],
        0.0)
    h1_bf = h1.astype(jnp.bfloat16)
    mu = jnp.dot(h1_bf, w21_ref[...], preferred_element_type=jnp.float32) + b21_ref[...]
    logvar = jnp.dot(h1_bf, w22_ref[...], preferred_element_type=jnp.float32) + b22_ref[...]

    # reparameterize: z = mu + eps * exp(0.5 * logvar)
    # (padded latent columns: mu = logvar = eps = 0 -> z = 0 exactly)
    z = mu + eps_ref[...] * jnp.exp(0.5 * logvar)
    z_ref[...] = z

    # cosine row-normalization; rsqrt -> EUP slot; ||z|| clamped at 1e-8
    # (torch cosine_similarity semantics).
    sumsq = jnp.sum(z * z, axis=-1, keepdims=True)
    inv_norm = jax.lax.rsqrt(jnp.maximum(sumsq, jnp.float32(1e-16)))
    zn_ref[...] = (z * inv_norm).astype(zn_ref.dtype)


def run_encode(x, params, eps):
    n = x.shape[0]
    latent_pad = params["w21"].shape[1]
    vmem = pl.BlockSpec(memory_space=pltpu.MemorySpace.VMEM)
    return pl.pallas_call(
        vae_encode_kernel,
        out_shape=(jax.ShapeDtypeStruct((n, latent_pad), jnp.float32),   # z
                   jax.ShapeDtypeStruct((n, latent_pad), jnp.bfloat16)), # zn
        in_specs=[vmem] * 8,
        out_specs=(vmem, vmem),
        compiler_params=pltpu.CompilerParams(vmem_limit_bytes=_VMEM_LIMIT),
    )(x, params["w1"], params["b1"], params["w21"], params["b21"],
      params["w22"], params["b22"], eps)


# ----------------------------------------------------------------------------
# Kernel 2: (row, col)-gridded cosine-distance matrix, bf16 output
# ----------------------------------------------------------------------------
def dist_kernel(zr_ref, zc_ref, dist_ref):
    # contract the last axis of both operands: no explicit zn.T materialization
    sim = jax.lax.dot_general(zr_ref[...], zc_ref[...],
                              (((1,), (1,)), ((), ())),
                              preferred_element_type=jnp.float32)
    dist_ref[...] = (1.0 - sim).astype(dist_ref.dtype)


def run_distance(zn, *, tile_r=128, tile_c=128):
    n, latent_pad = zn.shape
    tile_r = min(tile_r, n)
    tile_c = min(tile_c, n)
    grid = (pl.cdiv(n, tile_r), pl.cdiv(n, tile_c))
    return pl.pallas_call(
        dist_kernel,
        out_shape=jax.ShapeDtypeStruct((n, n), jnp.bfloat16),
        grid=grid,
        in_specs=[pl.BlockSpec((tile_r, latent_pad), lambda i, j: (i, 0)),
                  pl.BlockSpec((tile_c, latent_pad), lambda i, j: (j, 0))],
        out_specs=pl.BlockSpec((tile_r, tile_c), lambda i, j: (i, j)),
        compiler_params=pltpu.CompilerParams(
            dimension_semantics=("parallel", "parallel"),
            vmem_limit_bytes=_VMEM_LIMIT),
    )(zn, zn)


# ----------------------------------------------------------------------------
# Kernel 3 (fused): cluster centroids via one-hot label matmul (nanmean
# semantics, one-hot padded to 8 sublanes) + spectral-normed critic MLP.
# ----------------------------------------------------------------------------
def centroid_critic_kernel(onehot_ref, z_ref, cw1_ref, cb1_ref,
                           cw2_ref, cb2_ref, cw3_ref, cb3_ref, out_ref):
    onehot = onehot_ref[...]                      # (8, n): rows 0/1 real, 2..7 zero pad
    z = z_ref[...]                                # (n, latent_pad) f32

    # np.nanmean per cluster: masked sums / counts (kept f32 for exactness)
    valid = jnp.isfinite(z)
    z_clean = jnp.where(valid, z, 0.0)
    sums = jnp.dot(onehot, z_clean, preferred_element_type=jnp.float32)      # (8, L)
    counts = jnp.dot(onehot, valid.astype(jnp.float32),
                     preferred_element_type=jnp.float32)                     # (8, L)
    centroids = sums / counts        # padded rows: 0/0 -> NaN, sliced off on host

    # critic: Linear -> LeakyReLU(0.2) -> Linear -> LeakyReLU(0.2) -> Linear
    # bf16 MXU feeds, f32 accumulation / elementwise.
    h = jnp.dot(centroids.astype(jnp.bfloat16), cw1_ref[...],
                preferred_element_type=jnp.float32) + cb1_ref[...]
    h = jnp.where(h > 0, h, 0.2 * h)
    h = jnp.dot(h.astype(jnp.bfloat16), cw2_ref[...],
                preferred_element_type=jnp.float32) + cb2_ref[...]
    h = jnp.where(h > 0, h, 0.2 * h)
    out_ref[...] = jnp.dot(h.astype(jnp.bfloat16), cw3_ref[...],
                           preferred_element_type=jnp.float32) + cb3_ref[...]


def run_centroid_critic(onehot, z, params):
    # TODO(synk): for very large n, grid this over n-blocks ("arbitrary" axis)
    # accumulating sums/counts in an (8, latent_pad) VMEM scratch and finalize
    # the divide + critic MLP on the last grid step (v7x 64 MiB VMEM).
    vmem = pl.BlockSpec(memory_space=pltpu.MemorySpace.VMEM)
    return pl.pallas_call(
        centroid_critic_kernel,
        out_shape=jax.ShapeDtypeStruct((8, 1), jnp.float32),
        in_specs=[vmem] * 8,
        out_specs=vmem,
        compiler_params=pltpu.CompilerParams(vmem_limit_bytes=_VMEM_LIMIT),
    )(onehot, z, params["cw1"], params["cb1"], params["cw2"], params["cb2"],
      params["cw3"], params["cb3"])


# ----------------------------------------------------------------------------
# Host glue: complete-linkage agglomerative clustering into 2 clusters.
# Vectorized numpy Lance-Williams update (complete linkage: d_new = max(d_a, d_b)).
# Semantics of sklearn AgglomerativeClustering(metric='precomputed',
# linkage='complete', n_clusters=2 default).
# ----------------------------------------------------------------------------
def complete_linkage_two_clusters(dist):
    d = np.array(dist, dtype=np.float64, copy=True)
    n = d.shape[0]
    np.fill_diagonal(d, np.inf)
    active = np.ones(n, dtype=bool)
    labels = np.arange(n)
    n_clusters = n
    while n_clusters > 2:
        masked = np.where(active[:, None] & active[None, :], d, np.inf)
        idx = int(np.argmin(masked))
        a, b = divmod(idx, n)
        if a > b:
            a, b = b, a
        new_d = np.maximum(d[a], d[b])         # complete linkage merge
        d[a, :] = new_d
        d[:, a] = new_d
        d[a, a] = np.inf
        d[b, :] = np.inf
        d[:, b] = np.inf
        active[b] = False
        labels[labels == b] = a
        n_clusters -= 1
    out = np.zeros(n, dtype=np.int64)
    for i, u in enumerate(np.unique(labels)):
        out[labels == u] = i
    return out


def spectral_normalize(w):
    # spectral_norm at inference: W / sigma_max(W)
    # TODO(synk): PyTorch spectral_norm uses power iteration with a persisted u
    # vector; exact SVD gives a small expected numeric divergence.
    w = np.asarray(w, dtype=np.float64)
    sigma = np.linalg.svd(w, compute_uv=False)[0]
    return (w / sigma).astype(np.float32)


# ----------------------------------------------------------------------------
# Full forward
# ----------------------------------------------------------------------------
def vae_trend_critic_forward(rating_matrix, params, eps):
    z, zn = run_encode(rating_matrix, params, eps)
    dist = jax.block_until_ready(run_distance(zn))

    # Only the (n, n) bf16 distance matrix leaves the device; z stays resident.
    dist_np = np.asarray(dist.astype(jnp.float32), dtype=np.float64)
    # Sanitize before clustering: users with zero ratings produce NaN rows
    # (sklearn would raise); bf16 rounding can make the diagonal slightly < 0.
    dist_np = np.where(np.isnan(dist_np), 2.0, dist_np)   # max possible cosine distance
    dist_np = np.maximum(dist_np, 0.0)

    labels = complete_linkage_two_clusters(dist_np)
    n = labels.shape[0]
    onehot = np.zeros((8, n), dtype=np.float32)            # padded 2 -> 8 sublanes
    onehot[labels, np.arange(n)] = 1.0

    validity8 = run_centroid_critic(jnp.asarray(onehot), z, params)
    return validity8[:2]                                   # drop padded (NaN) rows


# ----------------------------------------------------------------------------
# Deterministic parameter construction (lane-padded, MXU weights in bf16)
# ----------------------------------------------------------------------------
def _pad2d(a, rows, cols):
    a = np.asarray(a, dtype=np.float32)
    out = np.zeros((rows, cols), dtype=np.float32)
    out[: a.shape[0], : a.shape[1]] = a
    return out


def make_params(key, input_dim, latent_dim, vae_hidden_dim):
    latent_pad = _round_up(latent_dim, LANE)
    hidden_pad = _round_up(vae_hidden_dim, LANE)
    c1_pad = _round_up(64, LANE)
    c2_pad = _round_up(32, LANE)

    ks = jax.random.split(key, 12)
    scale = 0.1

    def lin(k, fi, fo):
        return np.asarray(scale * jax.random.normal(k, (fi, fo), jnp.float32))

    def vec(k, fo):
        return np.asarray(scale * jax.random.normal(k, (1, fo), jnp.float32))

    # zero padding of extra lanes keeps padded h1 / mu / logvar / centroid
    # columns exactly 0, so padding never perturbs the real computation.
    params = {
        "w1":  jnp.asarray(_pad2d(lin(ks[0], input_dim, vae_hidden_dim),
                                  input_dim, hidden_pad), jnp.bfloat16),
        "b1":  jnp.asarray(_pad2d(vec(ks[1], vae_hidden_dim), 1, hidden_pad)),
        "w21": jnp.asarray(_pad2d(lin(ks[2], vae_hidden_dim, latent_dim),
                                  hidden_pad, latent_pad), jnp.bfloat16),
        "b21": jnp.asarray(_pad2d(vec(ks[3], latent_dim), 1, latent_pad)),
        "w22": jnp.asarray(_pad2d(lin(ks[4], vae_hidden_dim, latent_dim),
                                  hidden_pad, latent_pad), jnp.bfloat16),
        "b22": jnp.asarray(_pad2d(vec(ks[5], latent_dim), 1, latent_pad)),
    }
    # critic weights: spectral-normalize the real block, then zero-pad
    # (zero padding does not change the spectral norm).
    cw1 = spectral_normalize(lin(ks[6], latent_dim, 64))
    cw2 = spectral_normalize(lin(ks[8], 64, 32))
    cw3 = spectral_normalize(lin(ks[10], 32, 1))
    params["cw1"] = jnp.asarray(_pad2d(cw1, latent_pad, c1_pad), jnp.bfloat16)
    params["cb1"] = jnp.asarray(_pad2d(vec(ks[7], 64), 1, c1_pad))
    params["cw2"] = jnp.asarray(_pad2d(cw2, c1_pad, c2_pad), jnp.bfloat16)
    params["cb2"] = jnp.asarray(_pad2d(vec(ks[9], 32), 1, c2_pad))
    params["cw3"] = jnp.asarray(_pad2d(cw3, c2_pad, 1), jnp.bfloat16)
    params["cb3"] = jnp.asarray(vec(ks[11], 1))
    return params, latent_pad


if __name__ == "__main__":
    key = jax.random.PRNGKey(0)
    k_x, k_eps, k_p = jax.random.split(key, 3)

    n_users = 256        # users (rows of the rating matrix) -> (2,2) dist grid
    input_dim = 256      # items
    latent_dim = 16      # padded to 128 lanes
    vae_hidden_dim = 64  # padded to 128 lanes

    # ratings in (0, 5]; practically no exact zeros, so the NaN path stays dormant
    rating_matrix = jax.random.uniform(k_x, (n_users, input_dim), jnp.float32,
                                       minval=0.05, maxval=5.0)

    params, latent_pad = make_params(k_p, input_dim, latent_dim, vae_hidden_dim)

    # eps only on the real latent dims; padded columns are exact zeros so the
    # padded z columns stay exactly 0.
    eps_raw = jax.random.normal(k_eps, (n_users, latent_dim), jnp.float32)
    eps = jnp.zeros((n_users, latent_pad), jnp.float32).at[:, :latent_dim].set(eps_raw)

    validity = vae_trend_critic_forward(rating_matrix, params, eps)
    validity = jax.block_until_ready(validity)

    assert validity.shape == (2, 1)
    assert bool(jnp.all(jnp.isfinite(validity)))
    print("KERNEL_OK")
</pallas_src>

<mosaic_0001>
module attributes {stable_mosaic.version = 11 : i64} {
  func.func @vae_encode_kernel(%arg0: memref<256x256xf32, #tpu.memory_space<vmem>>, %arg1: memref<256x128xbf16, #tpu.memory_space<vmem>>, %arg2: memref<1x128xf32, #tpu.memory_space<vmem>>, %arg3: memref<128x128xbf16, #tpu.memory_space<vmem>>, %arg4: memref<1x128xf32, #tpu.memory_space<vmem>>, %arg5: memref<128x128xbf16, #tpu.memory_space<vmem>>, %arg6: memref<1x128xf32, #tpu.memory_space<vmem>>, %arg7: memref<256x128xf32, #tpu.memory_space<vmem>>, %arg8: memref<256x128xf32, #tpu.memory_space<vmem>>, %arg9: memref<256x128xbf16, #tpu.memory_space<vmem>>) attributes {dimension_semantics = [], scalar_prefetch = 0 : i64, scratch_operands = 0 : i64, tpu.core_type = #tpu.core_type<tc>} {
    %c0 = arith.constant 0 : index
    %c0_0 = arith.constant 0 : index
    %0 = vector.load %arg0[%c0, %c0_0] : memref<256x256xf32, #tpu.memory_space<vmem>>, vector<256x256xf32>
    %cst = arith.constant 0.000000e+00 : f32
    %1 = vector.broadcast %cst : f32 to vector<256x256xf32>
    %2 = arith.cmpf oeq, %0, %1 : vector<256x256xf32>
    %cst_1 = arith.constant 0x7FC00000 : f32
    %3 = vector.broadcast %cst_1 : f32 to vector<256x256xf32>
    %4 = arith.select %2, %3, %0 : vector<256x256xi1>, vector<256x256xf32>
    %5 = arith.cmpf one, %4, %4 : vector<256x256xf32>
    %cst_2 = arith.constant 0xFF800000 : f32
    %6 = vector.broadcast %cst_2 : f32 to vector<256x256xf32>
    %7 = arith.select %5, %6, %4 : vector<256x256xi1>, vector<256x256xf32>
    %8 = vector.shape_cast %7 : vector<256x256xf32> to vector<1x256x256xf32>
    %cst_3 = arith.constant dense<0xFF800000> : vector<1xf32>
    %9 = vector.multi_reduction <maximumf>, %8, %cst_3 [1, 2] : vector<1x256x256xf32> to vector<1xf32>
    %10 = vector.shape_cast %9 : vector<1xf32> to vector<1x1x1xf32>
    %11 = vector.extract %10[0, 0, 0] : f32 from vector<1x1x1xf32>
    %cst_4 = arith.constant 1.000000e+00 : f32
    %12 = arith.divf %cst_4, %11 : f32
    %13 = vector.broadcast %12 : f32 to vector<256x256xf32>
    %14 = arith.mulf %4, %13 : vector<256x256xf32>
    %15 = arith.truncf %14 : vector<256x256xf32> to vector<256x256xbf16>
    %c0_5 = arith.constant 0 : index
    %c0_6 = arith.constant 0 : index
    %16 = vector.load %arg1[%c0_5, %c0_6] : memref<256x128xbf16, #tpu.memory_space<vmem>>, vector<256x128xbf16>
    %cst_7 = arith.constant dense<0.000000e+00> : vector<256x128xf32>
    %17 = tpu.matmul %15, %16, %cst_7 {dimension_numbers = #tpu.dot_dimension_numbers<[1], [0], [0], [1], [0, 0, 1, 1], [], []>} : vector<256x256xbf16>, vector<256x128xbf16>, vector<256x128xf32> -> vector<256x128xf32>
    %c0_8 = arith.constant 0 : index
    %c0_9 = arith.constant 0 : index
    %18 = vector.load %arg2[%c0_8, %c0_9] : memref<1x128xf32, #tpu.memory_space<vmem>>, vector<1x128xf32>
    %19 = vector.broadcast %18 : vector<1x128xf32> to vector<256x128xf32>
    %20 = arith.addf %17, %19 : vector<256x128xf32>
    %cst_10 = arith.constant 0.000000e+00 : f32
    %21 = vector.broadcast %cst_10 : f32 to vector<256x128xf32>
    %22 = arith.maximumf %20, %21 : vector<256x128xf32>
    %23 = arith.truncf %22 : vector<256x128xf32> to vector<256x128xbf16>
    %c0_11 = arith.constant 0 : index
    %c0_12 = arith.constant 0 : index
    %24 = vector.load %arg3[%c0_11, %c0_12] : memref<128x128xbf16, #tpu.memory_space<vmem>>, vector<128x128xbf16>
    %cst_13 = arith.constant dense<0.000000e+00> : vector<256x128xf32>
    %25 = tpu.matmul %23, %24, %cst_13 {dimension_numbers = #tpu.dot_dimension_numbers<[1], [0], [0], [1], [0, 0, 1, 1], [], []>} : vector<256x128xbf16>, vector<128x128xbf16>, vector<256x128xf32> -> vector<256x128xf32>
    %c0_14 = arith.constant 0 : index
    %c0_15 = arith.constant 0 : index
    %26 = vector.load %arg4[%c0_14, %c0_15] : memref<1x128xf32, #tpu.memory_space<vmem>>, vector<1x128xf32>
    %27 = vector.broadcast %26 : vector<1x128xf32> to vector<256x128xf32>
    %28 = arith.addf %25, %27 : vector<256x128xf32>
    %c0_16 = arith.constant 0 : index
    %c0_17 = arith.constant 0 : index
    %29 = vector.load %arg5[%c0_16, %c0_17] : memref<128x128xbf16, #tpu.memory_space<vmem>>, vector<128x128xbf16>
    %cst_18 = arith.constant dense<0.000000e+00> : vector<256x128xf32>
    %30 = tpu.matmul %23, %29, %cst_18 {dimension_numbers = #tpu.dot_dimension_numbers<[1], [0], [0], [1], [0, 0, 1, 1], [], []>} : vector<256x128xbf16>, vector<128x128xbf16>, vector<256x128xf32> -> vector<256x128xf32>
    %c0_19 = arith.constant 0 : index
    %c0_20 = arith.constant 0 : index
    %31 = vector.load %arg6[%c0_19, %c0_20] : memref<1x128xf32, #tpu.memory_space<vmem>>, vector<1x128xf32>
    %32 = vector.broadcast %31 : vector<1x128xf32> to vector<256x128xf32>
    %33 = arith.addf %30, %32 : vector<256x128xf32>
    %c0_21 = arith.constant 0 : index
    %c0_22 = arith.constant 0 : index
    %34 = vector.load %arg7[%c0_21, %c0_22] : memref<256x128xf32, #tpu.memory_space<vmem>>, vector<256x128xf32>
    %cst_23 = arith.constant 5.000000e-01 : f32
    %35 = vector.broadcast %cst_23 : f32 to vector<256x128xf32>
    %36 = arith.mulf %35, %33 : vector<256x128xf32>
    %37 = math.exp %36 : vector<256x128xf32>
    %38 = arith.mulf %34, %37 : vector<256x128xf32>
    %39 = arith.addf %28, %38 : vector<256x128xf32>
    %c0_24 = arith.constant 0 : index
    %c0_25 = arith.constant 0 : index
    %40 = vector.load %arg8[%c0_24, %c0_25] : memref<256x128xf32, #tpu.memory_space<vmem>>, vector<256x128xf32>
    tpu.vector_store %arg8[%c0_24, %c0_25], %39 {strides = array<i32>} : memref<256x128xf32, #tpu.memory_space<vmem>>, vector<256x128xf32>,
    %41 = arith.mulf %39, %39 : vector<256x128xf32>
    %cst_26 = arith.constant dense<0.000000e+00> : vector<256xf32>
    %42 = vector.multi_reduction <add>, %41, %cst_26 [1] : vector<256x128xf32> to vector<256xf32>
    %43 = vector.shape_cast %42 : vector<256xf32> to vector<256x1xf32>
    %cst_27 = arith.constant 1.000000e-16 : f32
    %44 = vector.broadcast %cst_27 : f32 to vector<256x1xf32>
    %45 = arith.maximumf %43, %44 : vector<256x1xf32>
    %46 = math.rsqrt %45 : vector<256x1xf32>
    %47 = vector.broadcast %46 : vector<256x1xf32> to vector<256x128xf32>
    %48 = arith.mulf %39, %47 : vector<256x128xf32>
    %49 = arith.truncf %48 : vector<256x128xf32> to vector<256x128xbf16>
    %c0_28 = arith.constant 0 : index
    %c0_29 = arith.constant 0 : index
    %50 = vector.load %arg9[%c0_28, %c0_29] : memref<256x128xbf16, #tpu.memory_space<vmem>>, vector<256x128xbf16>
    tpu.vector_store %arg9[%c0_28, %c0_29], %49 {strides = array<i32>} : memref<256x128xbf16, #tpu.memory_space<vmem>>, vector<256x128xbf16>,
    return
  }
}

</mosaic_0001>

<llo_original>
// kernel: tpu_custom_call.1
$region0: #{tpu_custom_call.1}
  #allocation0 [shape = 'u32[]', space=smem, size = 0x4, offset = 0x4, fixed_abs, tag = 'smem constant byte address 0x4 - core index']
  #allocation1 [shape = 'u32[72,128]{1,0:T(1,128)}', space=vmem, size = 0x9000, scoped, tag = 'internal scratch']
  %s0 = inlined_call_operand.hbm [shape: f32[256,256], index: 0, kind: input, shape index: {}]
  %s1 = inlined_call_operand.hbm [shape: bf16[256,128], index: 1, kind: input, shape index: {}]
  %s2 = inlined_call_operand.vmem [shape: f32[1,128], index: 2, kind: input, shape index: {}]
  %s3 = inlined_call_operand.hbm [shape: bf16[128,128], index: 3, kind: input, shape index: {}]
  %s4 = inlined_call_operand.vmem [shape: f32[1,128], index: 4, kind: input, shape index: {}]
  %s5 = inlined_call_operand.hbm [shape: bf16[128,128], index: 5, kind: input, shape index: {}]
  %s6 = inlined_call_operand.vmem [shape: f32[1,128], index: 6, kind: input, shape index: {}]
  %s7 = inlined_call_operand.hbm [shape: f32[256,128], index: 7, kind: input, shape index: {}]
  %s8 = inlined_call_operand.hbm [shape: f32[256,128], index: 8, kind: output, shape index: {0}]
  %s9 = inlined_call_operand.hbm [shape: bf16[256,128], index: 9, kind: output, shape index: {1}]
  %10 = xla_tuple %s8, %s9
  %s11 = sld [smem:[#allocation0]]
  $region70: #{tpu_custom_call.1} parent=0
    _
  %s13 = ssub.s32 1, %s11
  %s14 = scalar_select 0, %s13, %s11
  $region1: #{tpu_custom_call.1} parent=0
    #allocation2 [shape = 'u8[262144]{0}', space=vmem, size = 0x40000, scoped, tag = 'input window, operand 0, single buffered']
    #allocation3 [shape = 's32[1]{0}', space=sflag, size = 0x4, scoped, tag = 'scoped memory for tpu_custom_call.1']
    #allocation4 [shape = 's32[1]{0}', space=sflag, size = 0x4, scoped, tag = 'scoped memory for tpu_custom_call.1']
    #allocation5 [shape = 'u8[65536]{0}', space=vmem, size = 0x10000, scoped, tag = 'input window, operand 1, single buffered']
    #allocation6 [shape = 's32[1]{0}', space=sflag, size = 0x4, scoped, tag = 'scoped memory for tpu_custom_call.1']
    #allocation7 [shape = 'u8[32768]{0}', space=vmem, size = 0x8000, scoped, tag = 'input window, operand 3, single buffered']
    #allocation8 [shape = 'u8[32768]{0}', space=vmem, size = 0x8000, scoped, tag = 'input window, operand 5, single buffered']
    #allocation9 [shape = 's32[1]{0}', space=sflag, size = 0x4, scoped, tag = 'scoped memory for tpu_custom_call.1']
    #allocation10 [shape = 'u8[131072]{0}', space=vmem, size = 0x20000, scoped, tag = 'input window, operand 7, single buffered']
    #allocation11 [shape = 'u8[131072]{0}', space=vmem, size = 0x20000, scoped, tag = 'output window, operand 0, single buffered']
    #allocation12 [shape = 'u8[65536]{0}', space=vmem, size = 0x10000, scoped, tag = 'output window, operand 1, single buffered']
    #allocation13 [shape = 's32[1]{0}', space=sflag, size = 0x4, scoped, tag = 'scoped memory for tpu_custom_call.1']
    %15 = vsyncpa [#allocation3], 0
    %16 = vsyncpa [#allocation6], 0
    %17 = vsyncpa [#allocation9], 0
    %18 = vsyncpa [#allocation4], 0
    %19 = vsyncpa [#allocation13], 0
    // Predicated region
    $region2: #{tpu_custom_call.1} parent=1 // pred_check
      _
    $region3: #{tpu_custom_call.1} parent=1 // pred_check_branch
      %21 = sbr.rel (0) target = $region5
    $region4: #{tpu_custom_call.1} parent=1 // pred_region
      %23 = vsyncadd [#allocation3], 0
      %s24 = sshll.u32 %s0, 4
      %s25 = int_to_ptr.hbm [resolvable:$true] %s24
      %s26 = sshll.u32 [#allocation2], 4
      %s27 = int_to_ptr.vmem [resolvable:$true] %s26
      %32 = dma.hbm_to_vmem [thread:$0]  %s25, 8192, %s27, [#allocation3], 256, 256, 16
    $region5: #{tpu_custom_call.1} parent=1 // pred_fallthru
      _
    // Predicated region
    $region6: #{tpu_custom_call.1} parent=1 // pred_check
      _
    $region7: #{tpu_custom_call.1} parent=1 // pred_check_branch
      %34 = sbr.rel (0) target = $region9
    $region8: #{tpu_custom_call.1} parent=1 // pred_region
      %36 = vsyncadd [#allocation6], 0
      %s37 = sshll.u32 %s1, 4
      %s38 = int_to_ptr.hbm [resolvable:$true] %s37
      %s39 = sshll.u32 [#allocation5], 4
      %s40 = int_to_ptr.vmem [resolvable:$true] %s39
      %45 = dma.hbm_to_vmem [thread:$0]  %s38, 2048, %s40, [#allocation6], 64, 64, 4
    $region9: #{tpu_custom_call.1} parent=1 // pred_fallthru
      _
    // Predicated region
    $region10: #{tpu_custom_call.1} parent=1 // pred_check
      _
    $region11: #{tpu_custom_call.1} parent=1 // pred_check_branch
      %47 = sbr.rel (0) target = $region13
    $region12: #{tpu_custom_call.1} parent=1 // pred_region
      _
    $region13: #{tpu_custom_call.1} parent=1 // pred_fallthru
      _
    // Predicated region
    $region14: #{tpu_custom_call.1} parent=1 // pred_check
      _
    $region15: #{tpu_custom_call.1} parent=1 // pred_check_branch
      %49 = sbr.rel (0) target = $region17
    $region16: #{tpu_custom_call.1} parent=1 // pred_region
      %51 = vsyncadd [#allocation6], 0
      %s52 = sshll.u32 %s3, 4
      %s53 = int_to_ptr.hbm [resolvable:$true] %s52
      %s54 = sshll.u32 [#allocation7], 4
      %s55 = int_to_ptr.vmem [resolvable:$true] %s54
      %60 = dma.hbm_to_vmem [thread:$0]  %s53, 1024, %s55, [#allocation6], 64, 64, 4
    $region17: #{tpu_custom_call.1} parent=1 // pred_fallthru
      _
    // Predicated region
    $region18: #{tpu_custom_call.1} parent=1 // pred_check
      _
    $region19: #{tpu_custom_call.1} parent=1 // pred_check_branch
      %62 = sbr.rel (0) target = $region21
    $region20: #{tpu_custom_call.1} parent=1 // pred_region
      _
    $region21: #{tpu_custom_call.1} parent=1 // pred_fallthru
      _
    // Predicated region
    $region22: #{tpu_custom_call.1} parent=1 // pred_check
      _
    $region23: #{tpu_custom_call.1} parent=1 // pred_check_branch
      %64 = sbr.rel (0) target = $region25
    $region24: #{tpu_custom_call.1} parent=1 // pred_region
      %66 = vsyncadd [#allocation9], 0
      %s67 = sshll.u32 %s5, 4
      %s68 = int_to_ptr.hbm [resolvable:$true] %s67
      %s69 = sshll.u32 [#allocation8], 4
      %s70 = int_to_ptr.vmem [resolvable:$true] %s69
      %75 = dma.hbm_to_vmem [thread:$0]  %s68, 1024, %s70, [#allocation9], 64, 64, 4
    $region25: #{tpu_custom_call.1} parent=1 // pred_fallthru
      _
    // Predicated region
    $region26: #{tpu_custom_call.1} parent=1 // pred_check
      _
    $region27: #{tpu_custom_call.1} parent=1 // pred_check_branch
      %77 = sbr.rel (0) target = $region29
    $region28: #{tpu_custom_call.1} parent=1 // pred_region
      _
    $region29: #{tpu_custom_call.1} parent=1 // pred_fallthru
      _
    // Predicated region
    $region30: #{tpu_custom_call.1} parent=1 // pred_check
      _
    $region31: #{tpu_custom_call.1} parent=1 // pred_check_branch
      %79 = sbr.rel (0) target = $region33
    $region32: #{tpu_custom_call.1} parent=1 // pred_region
      %81 = vsyncadd [#allocation9], 0
      %s82 = sshll.u32 %s7, 4
      %s83 = int_to_ptr.hbm [resolvable:$true] %s82
      %s84 = sshll.u32 [#allocation10], 4
      %s85 = int_to_ptr.vmem [resolvable:$true] %s84
      %90 = dma.hbm_to_vmem [thread:$0]  %s83, 4096, %s85, [#allocation9], 128, 128, 8
    $region33: #{tpu_custom_call.1} parent=1 // pred_fallthru
      _
    // Predicated region
    $region34: #{tpu_custom_call.1} parent=1 // pred_check
      _
    $region35: #{tpu_custom_call.1} parent=1 // pred_check_branch
      %92 = sbr.rel (0) target = $region37
    $region36: #{tpu_custom_call.1} parent=1 // pred_region
      %94 = dma.done [#allocation3], 8192
    $region37: #{tpu_custom_call.1} parent=1 // pred_fallthru
      _
    // Predicated region
    $region38: #{tpu_custom_call.1} parent=1 // pred_check
      _
    $region39: #{tpu_custom_call.1} parent=1 // pred_check_branch
      %96 = sbr.rel (0) target = $region41
    $region40: #{tpu_custom_call.1} parent=1 // pred_region
      %98 = dma.done [#allocation6], 2048
    $region41: #{tpu_custom_call.1} parent=1 // pred_fallthru
      _
    // Predicated region
    $region42: #{tpu_custom_call.1} parent=1 // pred_check
      _
    $region43: #{tpu_custom_call.1} parent=1 // pred_check_branch
      %100 = sbr.rel (0) target = $region45
    $region44: #{tpu_custom_call.1} parent=1 // pred_region
      %102 = dma.done [#allocation6], 1024
    $region45: #{tpu_custom_call.1} parent=1 // pred_fallthru
      _
    // Predicated region
    $region46: #{tpu_custom_call.1} parent=1 // pred_check
      _
    $region47: #{tpu_custom_call.1} parent=1 // pred_check_branch
      %104 = sbr.rel (0) target = $region49
    $region48: #{tpu_custom_call.1} parent=1 // pred_region
      %106 = dma.done [#allocation9], 1024
    $region49: #{tpu_custom_call.1} parent=1 // pred_fallthru
      _
    // Predicated region
    $region50: #{tpu_custom_call.1} parent=1 // pred_check
      _
    $region51: #{tpu_custom_call.1} parent=1 // pred_check_branch
      %108 = sbr.rel (0) target = $region53
    $region52: #{tpu_custom_call.1} parent=1 // pred_region
      %110 = dma.done [#allocation9], 4096
    $region53: #{tpu_custom_call.1} parent=1 // pred_fallthru
      _
    %v111 = vld [vmem:[#allocation2] sm:$0xff]
    %v112 = vld [vmem:[#allocation2 + $0x8] sm:$0xff]
    %v113 = vld [vmem:[#allocation2 + $0x10] sm:$0xff]
    %v114 = vld [vmem:[#allocation2 + $0x18] sm:$0xff]
    %v115 = vld [vmem:[#allocation2 + $0x20] sm:$0xff]
    %v116 = vld [vmem:[#allocation2 + $0x28] sm:$0xff]
    %v117 = vld [vmem:[#allocation2 + $0x30] sm:$0xff]
    %v118 = vld [vmem:[#allocation2 + $0x38] sm:$0xff]
    %v119 = vld [vmem:[#allocation2 + $0x40] sm:$0xff]
    %v120 = vld [vmem:[#allocation2 + $0x48] sm:$0xff]
    %v121 = vld [vmem:[#allocation2 + $0x50] sm:$0xff]
    %v122 = vld [vmem:[#allocation2 + $0x58] sm:$0xff]
    %v123 = vld [vmem:[#allocation2 + $0x60] sm:$0xff]
    %v124 = vld [vmem:[#allocation2 + $0x68] sm:$0xff]
    %v125 = vld [vmem:[#allocation2 + $0x70] sm:$0xff]
    %v126 = vld [vmem:[#allocation2 + $0x78] sm:$0xff]
    %v127 = vld [vmem:[#allocation2 + $0x80] sm:$0xff]
    %v128 = vld [vmem:[#allocation2 + $0x88] sm:$0xff]
    %v129 = vld [vmem:[#allocation2 + $0x90] sm:$0xff]
    %v130 = vld [vmem:[#allocation2 + $0x98] sm:$0xff]
    %v131 = vld [vmem:[#allocation2 + $0xa0] sm:$0xff]
    %v132 = vld [vmem:[#allocation2 + $0xa8] sm:$0xff]
    %v133 = vld [vmem:[#allocation2 + $0xb0] sm:$0xff]
    %v134 = vld [vmem:[#allocation2 + $0xb8] sm:$0xff]
    %v135 = vld [vmem:[#allocation2 + $0xc0] sm:$0xff]
    %v136 = vld [vmem:[#allocation2 + $0xc8] sm:$0xff]
    %v137 = vld [vmem:[#allocation2 + $0xd0] sm:$0xff]
    %v138 = vld [vmem:[#allocation2 + $0xd8] sm:$0xff]
    %v139 = vld [vmem:[#allocation2 + $0xe0] sm:$0xff]
    %v140 = vld [vmem:[#allocation2 + $0xe8] sm:$0xff]
    %v141 = vld [vmem:[#allocation2 + $0xf0] sm:$0xff]
    %v142 = vld [vmem:[#allocation2 + $0xf8] sm:$0xff]
    %v143 = vld [vmem:[#allocation2 + $0x100] sm:$0xff]
    %v144 = vld [vmem:[#allocation2 + $0x108] sm:$0xff]
    %v145 = vld [vmem:[#allocation2 + $0x110] sm:$0xff]
    %v146 = vld [vmem:[#allocation2 + $0x118] sm:$0xff]
    %v147 = vld [vmem:[#allocation2 + $0x120] sm:$0xff]
    %v148 = vld [vmem:[#allocation2 + $0x128] sm:$0xff]
    %v149 = vld [vmem:[#allocation2 + $0x130] sm:$0xff]
    %v150 = vld [vmem:[#allocation2 + $0x138] sm:$0xff]
    %v151 = vld [vmem:[#allocation2 + $0x140] sm:$0xff]
    %v152 = vld [vmem:[#allocation2 + $0x148] sm:$0xff]
    %v153 = vld [vmem:[#allocation2 + $0x150] sm:$0xff]
    %v154 = vld [vmem:[#allocation2 + $0x158] sm:$0xff]
    %v155 = vld [vmem:[#allocation2 + $0x160] sm:$0xff]
    %v156 = vld [vmem:[#allocation2 + $0x168] sm:$0xff]
    %v157 = vld [vmem:[#allocation2 + $0x170] sm:$0xff]
    %v158 = vld [vmem:[#allocation2 + $0x178] sm:$0xff]
    %v159 = vld [vmem:[#allocation2 + $0x180] sm:$0xff]
    %v160 = vld [vmem:[#allocation2 + $0x188] sm:$0xff]
    %v161 = vld [vmem:[#allocation2 + $0x190] sm:$0xff]
    %v162 = vld [vmem:[#allocation2 + $0x198] sm:$0xff]
    %v163 = vld [vmem:[#allocation2 + $0x1a0] sm:$0xff]
    %v164 = vld [vmem:[#allocation2 + $0x1a8] sm:$0xff]
    %v165 = vld [vmem:[#allocation2 + $0x1b0] sm:$0xff]
    %v166 = vld [vmem:[#allocation2 + $0x1b8] sm:$0xff]
    %v167 = vld [vmem:[#allocation2 + $0x1c0] sm:$0xff]
    %v168 = vld [vmem:[#allocation2 + $0x1c8] sm:$0xff]
    %v169 = vld [vmem:[#allocation2 + $0x1d0] sm:$0xff]
    %v170 = vld [vmem:[#allocation2 + $0x1d8] sm:$0xff]
    %v171 = vld [vmem:[#allocation2 + $0x1e0] sm:$0xff]
    %v172 = vld [vmem:[#allocation2 + $0x1e8] sm:$0xff]
    %v173 = vld [vmem:[#allocation2 + $0x1f0] sm:$0xff]
    %v174 = vld [vmem:[#allocation2 + $0x1f8] sm:$0xff]
    %vm175 = vcmp.eq.f32.partialorder %v111, 0.0
    %vm176 = vcmp.eq.f32.partialorder %v112, 0.0
    %vm177 = vcmp.eq.f32.partialorder %v113, 0.0
    %vm178 = vcmp.eq.f32.partialorder %v114, 0.0
    %vm179 = vcmp.eq.f32.partialorder %v115, 0.0
    %vm180 = vcmp.eq.f32.partialorder %v116, 0.0
    %vm181 = vcmp.eq.f32.partialorder %v117, 0.0
    %vm182 = vcmp.eq.f32.partialorder %v118, 0.0
    %vm183 = vcmp.eq.f32.partialorder %v119, 0.0
    %vm184 = vcmp.eq.f32.partialorder %v120, 0.0
    %vm185 = vcmp.eq.f32.partialorder %v121, 0.0
    %vm186 = vcmp.eq.f32.partialorder %v122, 0.0
    %vm187 = vcmp.eq.f32.partialorder %v123, 0.0
    %vm188 = vcmp.eq.f32.partialorder %v124, 0.0
    %vm189 = vcmp.eq.f32.partialorder %v125, 0.0
    %vm190 = vcmp.eq.f32.partialorder %v126, 0.0
    %vm191 = vcmp.eq.f32.partialorder %v127, 0.0
    %vm192 = vcmp.eq.f32.partialorder %v128, 0.0
    %vm193 = vcmp.eq.f32.partialorder %v129, 0.0
    %vm194 = vcmp.eq.f32.partialorder %v130, 0.0
    %vm195 = vcmp.eq.f32.partialorder %v131, 0.0
    %vm196 = vcmp.eq.f32.partialorder %v132, 0.0
    %vm197 = vcmp.eq.f32.partialorder %v133, 0.0
    %vm198 = vcmp.eq.f32.partialorder %v134, 0.0
    %vm199 = vcmp.eq.f32.partialorder %v135, 0.0
    %vm200 = vcmp.eq.f32.partialorder %v136, 0.0
    %vm201 = vcmp.eq.f32.partialorder %v137, 0.0
    %vm202 = vcmp.eq.f32.partialorder %v138, 0.0
    %vm203 = vcmp.eq.f32.partialorder %v139, 0.0
    %vm204 = vcmp.eq.f32.partialorder %v140, 0.0
    %vm205 = vcmp.eq.f32.partialorder %v141, 0.0
    %vm206 = vcmp.eq.f32.partialorder %v142, 0.0
    %vm207 = vcmp.eq.f32.partialorder %v143, 0.0
    %vm208 = vcmp.eq.f32.partialorder %v144, 0.0
    %vm209 = vcmp.eq.f32.partialorder %v145, 0.0
    %vm210 = vcmp.eq.f32.partialorder %v146, 0.0
    %vm211 = vcmp.eq.f32.partialorder %v147, 0.0
    %vm212 = vcmp.eq.f32.partialorder %v148, 0.0
    %vm213 = vcmp.eq.f32.partialorder %v149, 0.0
    %vm214 = vcmp.eq.f32.partialorder %v150, 0.0
    %vm215 = vcmp.eq.f32.partialorder %v151, 0.0
    %vm216 = vcmp.eq.f32.partialorder %v152, 0.0
    %vm217 = vcmp.eq.f32.partialorder %v153, 0.0
    %vm218 = vcmp.eq.f32.partialorder %v154, 0.0
    %vm219 = vcmp.eq.f32.partialorder %v155, 0.0
    %vm220 = vcmp.eq.f32.partialorder %v156, 0.0
    %vm221 = vcmp.eq.f32.partialorder %v157, 0.0
    %vm222 = vcmp.eq.f32.partialorder %v158, 0.0
    %vm223 = vcmp.eq.f32.partialorder %v159, 0.0
    %vm224 = vcmp.eq.f32.partialorder %v160, 0.0
    %vm225 = vcmp.eq.f32.partialorder %v161, 0.0
    %vm226 = vcmp.eq.f32.partialorder %v162, 0.0
    %vm227 = vcmp.eq.f32.partialorder %v163, 0.0
    %vm228 = vcmp.eq.f32.partialorder %v164, 0.0
    %vm229 = vcmp.eq.f32.partialorder %v165, 0.0
    %vm230 = vcmp.eq.f32.partialorder %v166, 0.0
    %vm231 = vcmp.eq.f32.partialorder %v167, 0.0
    %vm232 = vcmp.eq.f32.partialorder %v168, 0.0
    %vm233 = vcmp.eq.f32.partialorder %v169, 0.0
    %vm234 = vcmp.eq.f32.partialorder %v170, 0.0
    %vm235 = vcmp.eq.f32.partialorder %v171, 0.0
    %vm236 = vcmp.eq.f32.partialorder %v172, 0.0
    %vm237 = vcmp.eq.f32.partialorder %v173, 0.0
    %vm238 = vcmp.eq.f32.partialorder %v174, 0.0
    %v239 = vsel %vm175, nan, %v111
    %v240 = vsel %vm176, nan, %v112
    %v241 = vsel %vm177, nan, %v113
    %v242 = vsel %vm178, nan, %v114
    %v243 = vsel %vm179, nan, %v115
    %v244 = vsel %vm180, nan, %v116
    %v245 = vsel %vm181, nan, %v117
    %v246 = vsel %vm182, nan, %v118
    %v247 = vsel %vm183, nan, %v119
    %v248 = vsel %vm184, nan, %v120
    %v249 = vsel %vm185, nan, %v121
    %v250 = vsel %vm186, nan, %v122
    %v251 = vsel %vm187, nan, %v123
    %v252 = vsel %vm188, nan, %v124
    %v253 = vsel %vm189, nan, %v125
    %v254 = vsel %vm190, nan, %v126
    %v255 = vsel %vm191, nan, %v127
    %v256 = vsel %vm192, nan, %v128
    %v257 = vsel %vm193, nan, %v129
    %v258 = vsel %vm194, nan, %v130
    %v259 = vsel %vm195, nan, %v131
    %v260 = vsel %vm196, nan, %v132
    %v261 = vsel %vm197, nan, %v133
    %v262 = vsel %vm198, nan, %v134
    %v263 = vsel %vm199, nan, %v135
    %v264 = vsel %vm200, nan, %v136
    %v265 = vsel %vm201, nan, %v137
    %v266 = vsel %vm202, nan, %v138
    %v267 = vsel %vm203, nan, %v139
    %v268 = vsel %vm204, nan, %v140
    %v269 = vsel %vm205, nan, %v141
    %v270 = vsel %vm206, nan, %v142
    %v271 = vsel %vm207, nan, %v143
    %v272 = vsel %vm208, nan, %v144
    %v273 = vsel %vm209, nan, %v145
    %v274 = vsel %vm210, nan, %v146
    %v275 = vsel %vm211, nan, %v147
    %v276 = vsel %vm212, nan, %v148
    %v277 = vsel %vm213, nan, %v149
    %v278 = vsel %vm214, nan, %v150
    %v279 = vsel %vm215, nan, %v151
    %v280 = vsel %vm216, nan, %v152
    %v281 = vsel %vm217, nan, %v153
    %v282 = vsel %vm218, nan, %v154
    %v283 = vsel %vm219, nan, %v155
    %v284 = vsel %vm220, nan, %v156
    %v285 = vsel %vm221, nan, %v157
    %v286 = vsel %vm222, nan, %v158
    %v287 = vsel %vm223, nan, %v159
    %v288 = vsel %vm224, nan, %v160
    %v289 = vsel %vm225, nan, %v161
    %v290 = vsel %vm226, nan, %v162
    %v291 = vsel %vm227, nan, %v163
    %v292 = vsel %vm228, nan, %v164
    %v293 = vsel %vm229, nan, %v165
    %v294 = vsel %vm230, nan, %v166
    %v295 = vsel %vm231, nan, %v167
    %v296 = vsel %vm232, nan, %v168
    %v297 = vsel %vm233, nan, %v169
    %v298 = vsel %vm234, nan, %v170
    %v299 = vsel %vm235, nan, %v171
    %v300 = vsel %vm236, nan, %v172
    %v301 = vsel %vm237, nan, %v173
    %v302 = vsel %vm238, nan, %v174
    %vm303 = vcmp.ne.f32.partialorder %v239, %v239
    %vm304 = vcmp.ne.f32.partialorder %v240, %v240
    %vm305 = vcmp.ne.f32.partialorder %v241, %v241
    %vm306 = vcmp.ne.f32.partialorder %v242, %v242
    %vm307 = vcmp.ne.f32.partialorder %v243, %v243
    %vm308 = vcmp.ne.f32.partialorder %v244, %v244
    %vm309 = vcmp.ne.f32.partialorder %v245, %v245
    %vm310 = vcmp.ne.f32.partialorder %v246, %v246
    %vm311 = vcmp.ne.f32.partialorder %v247, %v247
    %vm312 = vcmp.ne.f32.partialorder %v248, %v248
    %vm313 = vcmp.ne.f32.partialorder %v249, %v249
    %vm314 = vcmp.ne.f32.partialorder %v250, %v250
    %vm315 = vcmp.ne.f32.partialorder %v251, %v251
    %vm316 = vcmp.ne.f32.partialorder %v252, %v252
    %vm317 = vcmp.ne.f32.partialorder %v253, %v253
    %vm318 = vcmp.ne.f32.partialorder %v254, %v254
    %vm319 = vcmp.ne.f32.partialorder %v255, %v255
    %vm320 = vcmp.ne.f32.partialorder %v256, %v256
    %vm321 = vcmp.ne.f32.partialorder %v257, %v257
    %vm322 = vcmp.ne.f32.partialorder %v258, %v258
    %vm323 = vcmp.ne.f32.partialorder %v259, %v259
    %vm324 = vcmp.ne.f32.partialorder %v260, %v260
    %vm325 = vcmp.ne.f32.partialorder %v261, %v261
    %vm326 = vcmp.ne.f32.partialorder %v262, %v262
    %vm327 = vcmp.ne.f32.partialorder %v263, %v263
    %vm328 = vcmp.ne.f32.partialorder %v264, %v264
    %vm329 = vcmp.ne.f32.partialorder %v265, %v265
    %vm330 = vcmp.ne.f32.partialorder %v266, %v266
    %vm331 = vcmp.ne.f32.partialorder %v267, %v267
    %vm332 = vcmp.ne.f32.partialorder %v268, %v268
    %vm333 = vcmp.ne.f32.partialorder %v269, %v269
    %vm334 = vcmp.ne.f32.partialorder %v270, %v270
    %vm335 = vcmp.ne.f32.partialorder %v271, %v271
    %vm336 = vcmp.ne.f32.partialorder %v272, %v272
    %vm337 = vcmp.ne.f32.partialorder %v273, %v273
    %vm338 = vcmp.ne.f32.partialorder %v274, %v274
    %vm339 = vcmp.ne.f32.partialorder %v275, %v275
    %vm340 = vcmp.ne.f32.partialorder %v276, %v276
    %vm341 = vcmp.ne.f32.partialorder %v277, %v277
    %vm342 = vcmp.ne.f32.partialorder %v278, %v278
    %vm343 = vcmp.ne.f32.partialorder %v279, %v279
    %vm344 = vcmp.ne.f32.partialorder %v280, %v280
    %vm345 = vcmp.ne.f32.partialorder %v281, %v281
    %vm346 = vcmp.ne.f32.partialorder %v282, %v282
    %vm347 = vcmp.ne.f32.partialorder %v283, %v283
    %vm348 = vcmp.ne.f32.partialorder %v284, %v284
    %vm349 = vcmp.ne.f32.partialorder %v285, %v285
    %vm350 = vcmp.ne.f32.partialorder %v286, %v286
    %vm351 = vcmp.ne.f32.partialorder %v287, %v287
    %vm352 = vcmp.ne.f32.partialorder %v288, %v288
    %vm353 = vcmp.ne.f32.partialorder %v289, %v289
    %vm354 = vcmp.ne.f32.partialorder %v290, %v290
    %vm355 = vcmp.ne.f32.partialorder %v291, %v291
    %vm356 = vcmp.ne.f32.partialorder %v292, %v292
    %vm357 = vcmp.ne.f32.partialorder %v293, %v293
    %vm358 = vcmp.ne.f32.partialorder %v294, %v294
    %vm359 = vcmp.ne.f32.partialorder %v295, %v295
    %vm360 = vcmp.ne.f32.partialorder %v296, %v296
    %vm361 = vcmp.ne.f32.partialorder %v297, %v297
    %vm362 = vcmp.ne.f32.partialorder %v298, %v298
    %vm363 = vcmp.ne.f32.partialorder %v299, %v299
    %vm364 = vcmp.ne.f32.partialorder %v300, %v300
    %vm365 = vcmp.ne.f32.partialorder %v301, %v301
    %vm366 = vcmp.ne.f32.partialorder %v302, %v302
    %v367 = vsel %vm303, -inf, %v239
    %v368 = vsel %vm304, -inf, %v240
    %v369 = vsel %vm305, -inf, %v241
    %v370 = vsel %vm306, -inf, %v242
    %v371 = vsel %vm307, -inf, %v243
    %v372 = vsel %vm308, -inf, %v244
    %v373 = vsel %vm309, -inf, %v245
    %v374 = vsel %vm310, -inf, %v246
    %v375 = vsel %vm311, -inf, %v247
    %v376 = vsel %vm312, -inf, %v248
    %v377 = vsel %vm313, -inf, %v249
    %v378 = vsel %vm314, -inf, %v250
    %v379 = vsel %vm315, -inf, %v251
    %v380 = vsel %vm316, -inf, %v252
    %v381 = vsel %vm317, -inf, %v253
    %v382 = vsel %vm318, -inf, %v254
    %v383 = vsel %vm319, -inf, %v255
    %v384 = vsel %vm320, -inf, %v256
    %v385 = vsel %vm321, -inf, %v257
    %v386 = vsel %vm322, -inf, %v258
    %v387 = vsel %vm323, -inf, %v259
    %v388 = vsel %vm324, -inf, %v260
    %v389 = vsel %vm325, -inf, %v261
    %v390 = vsel %vm326, -inf, %v262
    %v391 = vsel %vm327, -inf, %v263
    %v392 = vsel %vm328, -inf, %v264
    %v393 = vsel %vm329, -inf, %v265
    %v394 = vsel %vm330, -inf, %v266
    %v395 = vsel %vm331, -inf, %v267
    %v396 = vsel %vm332, -inf, %v268
    %v397 = vsel %vm333, -inf, %v269
    %v398 = vsel %vm334, -inf, %v270
    %v399 = vsel %vm335, -inf, %v271
    %v400 = vsel %vm336, -inf, %v272
    %v401 = vsel %vm337, -inf, %v273
    %v402 = vsel %vm338, -inf, %v274
    %v403 = vsel %vm339, -inf, %v275
    %v404 = vsel %vm340, -inf, %v276
    %v405 = vsel %vm341, -inf, %v277
    %v406 = vsel %vm342, -inf, %v278
    %v407 = vsel %vm343, -inf, %v279
    %v408 = vsel %vm344, -inf, %v280
    %v409 = vsel %vm345, -inf, %v281
    %v410 = vsel %vm346, -inf, %v282
    %v411 = vsel %vm347, -inf, %v283
    %v412 = vsel %vm348, -inf, %v284
    %v413 = vsel %vm349, -inf, %v285
    %v414 = vsel %vm350, -inf, %v286
    %v415 = vsel %vm351, -inf, %v287
    %v416 = vsel %vm352, -inf, %v288
    %v417 = vsel %vm353, -inf, %v289
    %v418 = vsel %vm354, -inf, %v290
    %v419 = vsel %vm355, -inf, %v291
    %v420 = vsel %vm356, -inf, %v292
    %v421 = vsel %vm357, -inf, %v293
    %v422 = vsel %vm358, -inf, %v294
    %v423 = vsel %vm359, -inf, %v295
    %v424 = vsel %vm360, -inf, %v296
    %v425 = vsel %vm361, -inf, %v297
    %v426 = vsel %vm362, -inf, %v298
    %v427 = vsel %vm363, -inf, %v299
    %v428 = vsel %vm364, -inf, %v300
    %v429 = vsel %vm365, -inf, %v301
    %v430 = vsel %vm366, -inf, %v302
    %v431 = vmax.f32 %v367, %v371
    %v432 = vmax.f32 %v368, %v372
    %v433 = vmax.f32 %v369, %v373
    %v434 = vmax.f32 %v370, %v374
    %v435 = vmax.f32 %v431, %v375
    %v436 = vmax.f32 %v432, %v376
    %v437 = vmax.f32 %v433, %v377
    %v438 = vmax.f32 %v434, %v378
    %v439 = vmax.f32 %v435, %v379
    %v440 = vmax.f32 %v436, %v380
    %v441 = vmax.f32 %v437, %v381
    %v442 = vmax.f32 %v438, %v382
    %v443 = vmax.f32 %v439, %v383
    %v444 = vmax.f32 %v440, %v384
    %v445 = vmax.f32 %v441, %v385
    %v446 = vmax.f32 %v442, %v386
    %v447 = vmax.f32 %v443, %v387
    %v448 = vmax.f32 %v444, %v388
    %v449 = vmax.f32 %v445, %v389
    %v450 = vmax.f32 %v446, %v390
    %v451 = vmax.f32 %v447, %v391
    %v452 = vmax.f32 %v448, %v392
    %v453 = vmax.f32 %v449, %v393
    %v454 = vmax.f32 %v450, %v394
    %v455 = vmax.f32 %v451, %v395
    %v456 = vmax.f32 %v452, %v396
    %v457 = vmax.f32 %v453, %v397
    %v458 = vmax.f32 %v454, %v398
    %v459 = vmax.f32 %v455, %v399
    %v460 = vmax.f32 %v456, %v400
    %v461 = vmax.f32 %v457, %v401
    %v462 = vmax.f32 %v458, %v402
    %v463 = vmax.f32 %v459, %v403
    %v464 = vmax.f32 %v460, %v404
    %v465 = vmax.f32 %v461, %v405
    %v466 = vmax.f32 %v462, %v406
    %v467 = vmax.f32 %v463, %v407
    %v468 = vmax.f32 %v464, %v408
    %v469 = vmax.f32 %v465, %v409
    %v470 = vmax.f32 %v466, %v410
    %v471 = vmax.f32 %v467, %v411
    %v472 = vmax.f32 %v468, %v412
    %v473 = vmax.f32 %v469, %v413
    %v474 = vmax.f32 %v470, %v414
    %v475 = vmax.f32 %v471, %v415
    %v476 = vmax.f32 %v472, %v416
    %v477 = vmax.f32 %v473, %v417
    %v478 = vmax.f32 %v474, %v418
    %v479 = vmax.f32 %v475, %v419
    %v480 = vmax.f32 %v476, %v420
    %v481 = vmax.f32 %v477, %v421
    %v482 = vmax.f32 %v478, %v422
    %v483 = vmax.f32 %v479, %v423
    %v484 = vmax.f32 %v480, %v424
    %v485 = vmax.f32 %v481, %v425
    %v486 = vmax.f32 %v482, %v426
    %v487 = vmax.f32 %v483, %v427
    %v488 = vmax.f32 %v484, %v428
    %v489 = vmax.f32 %v485, %v429
    %v490 = vmax.f32 %v486, %v430
    %v491 = vmax.f32 %v487, %v488
    %v492 = vmax.f32 %v489, %v490
    %v493 = vmax.f32 %v491, %v492
    %494 = vmax.xlane.f32.xlu0 %v493
    %v495 = vpop.xlane.xlu0 %494
    %v496 = vrot.slane %v495, 4
    %v497 = vmax.f32 %v495, %v496
    %v498 = vrot.slane %v497, 2
    %v499 = vmax.f32 %v497, %v498
    %v500 = vrot.slane %v499, 1
    %v501 = vmax.f32 %v499, %v500
    %s502 = vtos %v501
    %v503 = vstv %s502
    %v504 = vrcp.pop %v503
    %v505 = vmul.f32 %v503, %v504
    %v506 = vsub.f32 1.0, %v505
    %v507 = vmul.f32 %v504, %v506
    %v508 = vadd.f32 %v504, %v507
    %vm509 = vweird.f32 %v503
    %vm510 = vweird.f32 %v504
    %vm511 = vmor %vm509, %vm510
    %v512 = vsel %vm511, %v504, %v508
    %v513 = vand.u32 2147483647, %v503
    %vm514 = vcmp.eq.f32.partialorder %v513, 8.507059e+37
    %v515 = vand.u32 %v503, 2147483648
    %v516 = vor.u32 1.1754944e-38, %v515
    %v517 = vsel %vm514, %v516, %v512
    %s518 = vtos %v517
    %v519 = vstv %s518
    %v520 = vmul.f32 %v239, %v519
    %v521 = vmul.f32 %v240, %v519
    %v522 = vmul.f32 %v241, %v519
    %v523 = vmul.f32 %v242, %v519
    %v524 = vmul.f32 %v243, %v519
    %v525 = vmul.f32 %v244, %v519
    %v526 = vmul.f32 %v245, %v519
    %v527 = vmul.f32 %v246, %v519
    %v528 = vmul.f32 %v247, %v519
    %v529 = vmul.f32 %v248, %v519
    %v530 = vmul.f32 %v249, %v519
    %v531 = vmul.f32 %v250, %v519
    %v532 = vmul.f32 %v251, %v519
    %v533 = vmul.f32 %v252, %v519
    %v534 = vmul.f32 %v253, %v519
    %v535 = vmul.f32 %v254, %v519
    %v536 = vmul.f32 %v255, %v519
    %v537 = vmul.f32 %v256, %v519
    %v538 = vmul.f32 %v257, %v519
    %v539 = vmul.f32 %v258, %v519
    %v540 = vmul.f32 %v259, %v519
    %v541 = vmul.f32 %v260, %v519
    %v542 = vmul.f32 %v261, %v519
    %v543 = vmul.f32 %v262, %v519
    %v544 = vmul.f32 %v263, %v519
    %v545 = vmul.f32 %v264, %v519
    %v546 = vmul.f32 %v265, %v519
    %v547 = vmul.f32 %v266, %v519
    %v548 = vmul.f32 %v267, %v519
    %v549 = vmul.f32 %v268, %v519
    %v550 = vmul.f32 %v269, %v519
    %v551 = vmul.f32 %v270, %v519
    %v552 = vmul.f32 %v271, %v519
    %v553 = vmul.f32 %v272, %v519
    %v554 = vmul.f32 %v273, %v519
    %v555 = vmul.f32 %v274, %v519
    %v556 = vmul.f32 %v275, %v519
    %v557 = vmul.f32 %v276, %v519
    %v558 = vmul.f32 %v277, %v519
    %v559 = vmul.f32 %v278, %v519
    %v560 = vmul.f32 %v279, %v519
    %v561 = vmul.f32 %v280, %v519
    %v562 = vmul.f32 %v281, %v519
    %v563 = vmul.f32 %v282, %v519
    %v564 = vmul.f32 %v283, %v519
    %v565 = vmul.f32 %v284, %v519
    %v566 = vmul.f32 %v285, %v519
    %v567 = vmul.f32 %v286, %v519
    %v568 = vmul.f32 %v287, %v519
    %v569 = vmul.f32 %v288, %v519
    %v570 = vmul.f32 %v289, %v519
    %v571 = vmul.f32 %v290, %v519
    %v572 = vmul.f32 %v291, %v519
    %v573 = vmul.f32 %v292, %v519
    %v574 = vmul.f32 %v293, %v519
    %v575 = vmul.f32 %v294, %v519
    %v576 = vmul.f32 %v295, %v519
    %v577 = vmul.f32 %v296, %v519
    %v578 = vmul.f32 %v297, %v519
    %v579 = vmul.f32 %v298, %v519
    %v580 = vmul.f32 %v299, %v519
    %v581 = vmul.f32 %v300, %v519
    %v582 = vmul.f32 %v301, %v519
    %v583 = vmul.f32 %v302, %v519
    %v584 = vpack.c.bf16 %v522, %v520
    %v585 = vpack.c.bf16 %v523, %v521
    %v586 = vpack.c.bf16 %v526, %v524
    %v587 = vpack.c.bf16 %v527, %v525
    %v588 = vpack.c.bf16 %v530, %v528
    %v589 = vpack.c.bf16 %v531, %v529
    %v590 = vpack.c.bf16 %v534, %v532
    %v591 = vpack.c.bf16 %v535, %v533
    %v592 = vpack.c.bf16 %v538, %v536
    %v593 = vpack.c.bf16 %v539, %v537
    %v594 = vpack.c.bf16 %v542, %v540
    %v595 = vpack.c.bf16 %v543, %v541
    %v596 = vpack.c.bf16 %v546, %v544
    %v597 = vpack.c.bf16 %v547, %v545
    %v598 = vpack.c.bf16 %v550, %v548
    %v599 = vpack.c.bf16 %v551, %v549
    %v600 = vpack.c.bf16 %v554, %v552
    %v601 = vpack.c.bf16 %v555, %v553
    %v602 = vpack.c.bf16 %v558, %v556
    %v603 = vpack.c.bf16 %v559, %v557
    %v604 = vpack.c.bf16 %v562, %v560
    %v605 = vpack.c.bf16 %v563, %v561
    %v606 = vpack.c.bf16 %v566, %v564
    %v607 = vpack.c.bf16 %v567, %v565
    %v608 = vpack.c.bf16 %v570, %v568
    %v609 = vpack.c.bf16 %v571, %v569
    %v610 = vpack.c.bf16 %v574, %v572
    %v611 = vpack.c.bf16 %v575, %v573
    %v612 = vpack.c.bf16 %v578, %v576
    %v613 = vpack.c.bf16 %v579, %v577
    %v614 = vpack.c.bf16 %v582, %v580
    %v615 = vpack.c.bf16 %v583, %v581
    %v616 = vld [vmem:[#allocation5] sm:$0xf]
    %v617 = vld [vmem:[#allocation5 + $0x4] sm:$0xf]
    %v618 = vld [vmem:[#allocation5 + $0x8] sm:$0xf]
    %v619 = vld [vmem:[#allocation5 + $0xc] sm:$0xf]
    %v620 = vld [vmem:[#allocation5 + $0x10] sm:$0xf]
    %v621 = vld [vmem:[#allocation5 + $0x14] sm:$0xf]
    %v622 = vld [vmem:[#allocation5 + $0x18] sm:$0xf]
    %v623 = vld [vmem:[#allocation5 + $0x1c] sm:$0xf]
    %v624 = vld [vmem:[#allocation5 + $0x20] sm:$0xf]
    %v625 = vld [vmem:[#allocation5 + $0x24] sm:$0xf]
    %v626 = vld [vmem:[#allocation5 + $0x28] sm:$0xf]
    %v627 = vld [vmem:[#allocation5 + $0x2c] sm:$0xf]
    %v628 = vld [vmem:[#allocation5 + $0x30] sm:$0xf]
    %v629 = vld [vmem:[#allocation5 + $0x34] sm:$0xf]
    %v630 = vld [vmem:[#allocation5 + $0x38] sm:$0xf]
    %v631 = vld [vmem:[#allocation5 + $0x3c] sm:$0xf]
    %v632 = vld [vmem:[#allocation5 + $0x40] sm:$0xf]
    %v633 = vld [vmem:[#allocation5 + $0x44] sm:$0xf]
    %v634 = vld [vmem:[#allocation5 + $0x48] sm:$0xf]
    %v635 = vld [vmem:[#allocation5 + $0x4c] sm:$0xf]
    %v636 = vld [vmem:[#allocation5 + $0x50] sm:$0xf]
    %v637 = vld [vmem:[#allocation5 + $0x54] sm:$0xf]
    %v638 = vld [vmem:[#allocation5 + $0x58] sm:$0xf]
    %v639 = vld [vmem:[#allocation5 + $0x5c] sm:$0xf]
    %v640 = vld [vmem:[#allocation5 + $0x60] sm:$0xf]
    %v641 = vld [vmem:[#allocation5 + $0x64] sm:$0xf]
    %v642 = vld [vmem:[#allocation5 + $0x68] sm:$0xf]
    %v643 = vld [vmem:[#allocation5 + $0x6c] sm:$0xf]
    %v644 = vld [vmem:[#allocation5 + $0x70] sm:$0xf]
    %v645 = vld [vmem:[#allocation5 + $0x74] sm:$0xf]
    %v646 = vld [vmem:[#allocation5 + $0x78] sm:$0xf]
    %v647 = vld [vmem:[#allocation5 + $0x7c] sm:$0xf]
    %v648 = vld [vmem:[%s2] sm:$0x1]
    %v650 = vperm.slane %v648, 0
    %v684 = vunpack.c.l.b16 %v616
    %v685 = vunpack.c.l.b16 %v617
    %v686 = vunpack.c.l.b16 %v618
    %v687 = vunpack.c.l.b16 %v619
    %v688 = vunpack.c.l.b16 %v620
    %v689 = vunpack.c.l.b16 %v621
    %v690 = vunpack.c.l.b16 %v622
    %v691 = vunpack.c.l.b16 %v623
    %v692 = vunpack.c.l.b16 %v624
    %v693 = vunpack.c.l.b16 %v625
    %v694 = vunpack.c.l.b16 %v626
    %v695 = vunpack.c.l.b16 %v627
    %v696 = vunpack.c.l.b16 %v628
    %v697 = vunpack.c.l.b16 %v629
    %v698 = vunpack.c.l.b16 %v630
    %v699 = vunpack.c.l.b16 %v631
    %v700 = vunpack.c.l.b16 %v632
    %v701 = vunpack.c.l.b16 %v633
    %v702 = vunpack.c.l.b16 %v634
    %v703 = vunpack.c.l.b16 %v635
    %v704 = vunpack.c.l.b16 %v636
    %v705 = vunpack.c.l.b16 %v637
    %v706 = vunpack.c.l.b16 %v638
    %v707 = vunpack.c.l.b16 %v639
    %v708 = vunpack.c.l.b16 %v640
    %v709 = vunpack.c.l.b16 %v641
    %v710 = vunpack.c.l.b16 %v642
    %v711 = vunpack.c.l.b16 %v643
    %v712 = vunpack.c.l.b16 %v644
    %v713 = vunpack.c.l.b16 %v645
    %v714 = vunpack.c.l.b16 %v646
    %v715 = vunpack.c.l.b16 %v647
    %v716 = vpack.c.b16 %v685, %v684
    %v717 = vpack.c.b16 %v687, %v686
    %v718 = vpack.c.b16 %v689, %v688
    %v719 = vpack.c.b16 %v691, %v690
    %v720 = vpack.c.b16 %v693, %v692
    %v721 = vpack.c.b16 %v695, %v694
    %v722 = vpack.c.b16 %v697, %v696
    %v723 = vpack.c.b16 %v699, %v698
    %v724 = vpack.c.b16 %v701, %v700
    %v725 = vpack.c.b16 %v703, %v702
    %v726 = vpack.c.b16 %v705, %v704
    %v727 = vpack.c.b16 %v707, %v706
    %v728 = vpack.c.b16 %v709, %v708
    %v729 = vpack.c.b16 %v711, %v710
    %v730 = vpack.c.b16 %v713, %v712
    %v731 = vpack.c.b16 %v715, %v714
    %748 = vmatpush.bf16.msra.mxu0 %v723
    %749 = vmatpush.bf16.msra.mxu0 %v722
    %750 = vmatpush.bf16.msra.mxu0 %v721
    %751 = vmatpush.bf16.msra.mxu0 %v720
    %752 = vmatpush.bf16.msra.mxu0 %v719
    %753 = vmatpush.bf16.msra.mxu0 %v718
    %754 = vmatpush.bf16.msra.mxu0 %v717
    %755 = vmatpush.bf16.msra.mxu0 %v716
    %756 = vmatmul.bf16.gmra.mxu0 %v584
    %v757 = vpop.f32.mrf.mxu0
    %v758 = vadd.f32 %v650, %v757
    %v759 = vpop.f32.mrf.mxu0
    %v760 = vadd.f32 %v650, %v759
    %761 = vmatmul.bf16.gmra.mxu0 %v586
    %v762 = vpop.f32.mrf.mxu0
    %v763 = vadd.f32 %v650, %v762
    %v764 = vpop.f32.mrf.mxu0
    %v765 = vadd.f32 %v650, %v764
    %766 = vmatmul.bf16.gmra.mxu0 %v588
    %v767 = vpop.f32.mrf.mxu0
    %v768 = vadd.f32 %v650, %v767
    %v769 = vpop.f32.mrf.mxu0
    %v770 = vadd.f32 %v650, %v769
    %771 = vmatmul.bf16.gmra.mxu0 %v590
    %v772 = vpop.f32.mrf.mxu0
    %v773 = vadd.f32 %v650, %v772
    %v774 = vpop.f32.mrf.mxu0
    %v775 = vadd.f32 %v650, %v774
    %776 = vmatmul.bf16.gmra.mxu0 %v592
    %v777 = vpop.f32.mrf.mxu0
    %v778 = vadd.f32 %v650, %v777
    %v779 = vpop.f32.mrf.mxu0
    %v780 = vadd.f32 %v650, %v779
    %781 = vmatmul.bf16.gmra.mxu0 %v594
    %v782 = vpop.f32.mrf.mxu0
    %v783 = vadd.f32 %v650, %v782
    %v784 = vpop.f32.mrf.mxu0
    %v785 = vadd.f32 %v650, %v784
    %786 = vmatmul.bf16.gmra.mxu0 %v596
    %v787 = vpop.f32.mrf.mxu0
    %v788 = vadd.f32 %v650, %v787
    %v789 = vpop.f32.mrf.mxu0
    %v790 = vadd.f32 %v650, %v789
    %791 = vmatmul.bf16.gmra.mxu0 %v598
    %v792 = vpop.f32.mrf.mxu0
    %v793 = vadd.f32 %v650, %v792
    %v794 = vpop.f32.mrf.mxu0
    %v795 = vadd.f32 %v650, %v794
    %796 = vmatmul.bf16.gmra.mxu0 %v600
    %v797 = vpop.f32.mrf.mxu0
    %v798 = vadd.f32 %v650, %v797
    %v799 = vpop.f32.mrf.mxu0
    %v800 = vadd.f32 %v650, %v799
    %801 = vmatmul.bf16.gmra.mxu0 %v602
    %v802 = vpop.f32.mrf.mxu0
    %v803 = vadd.f32 %v650, %v802
    %v804 = vpop.f32.mrf.mxu0
    %v805 = vadd.f32 %v650, %v804
    %806 = vmatmul.bf16.gmra.mxu0 %v604
    %v807 = vpop.f32.mrf.mxu0
    %v808 = vadd.f32 %v650, %v807
    %v809 = vpop.f32.mrf.mxu0
    %v810 = vadd.f32 %v650, %v809
    %811 = vmatmul.bf16.gmra.mxu0 %v606
    %v812 = vpop.f32.mrf.mxu0
    %v813 = vadd.f32 %v650, %v812
    %v814 = vpop.f32.mrf.mxu0
    %v815 = vadd.f32 %v650, %v814
    %816 = vmatmul.bf16.gmra.mxu0 %v608
    %v817 = vpop.f32.mrf.mxu0
    %v818 = vadd.f32 %v650, %v817
    %v819 = vpop.f32.mrf.mxu0
    %v820 = vadd.f32 %v650, %v819
    %821 = vmatmul.bf16.gmra.mxu0 %v610
    %v822 = vpop.f32.mrf.mxu0
    %v823 = vadd.f32 %v650, %v822
    %v824 = vpop.f32.mrf.mxu0
    %v825 = vadd.f32 %v650, %v824
    %826 = vmatmul.bf16.gmra.mxu0 %v612
    %v827 = vpop.f32.mrf.mxu0
    %v828 = vadd.f32 %v650, %v827
    %v829 = vpop.f32.mrf.mxu0
    %v830 = vadd.f32 %v650, %v829
    %831 = vmatmul.bf16.gmra.mxu0 %v614
    %v832 = vpop.f32.mrf.mxu0
    %v833 = vadd.f32 %v650, %v832
    %v834 = vpop.f32.mrf.mxu0
    %v835 = vadd.f32 %v650, %v834
    %836 = vdwg.mxu0
    %837 = vmatpush.bf16.msra.mxu0 %v731
    %838 = vmatpush.bf16.msra.mxu0 %v730
    %839 = vmatpush.bf16.msra.mxu0 %v729
    %840 = vmatpush.bf16.msra.mxu0 %v728
    %841 = vmatpush.bf16.msra.mxu0 %v727
    %842 = vmatpush.bf16.msra.mxu0 %v726
    %843 = vmatpush.bf16.msra.mxu0 %v725
    %844 = vmatpush.bf16.msra.mxu0 %v724
    %845 = vmatmul.bf16.gmra.mxu0 %v585
    %v846 = vpop.f32.mrf.mxu0
    %v847 = vadd.f32 %v758, %v846
    %v848 = vpop.f32.mrf.mxu0
    %v849 = vadd.f32 %v760, %v848
    %850 = vmatmul.bf16.gmra.mxu0 %v587
    %v851 = vpop.f32.mrf.mxu0
    %v852 = vadd.f32 %v763, %v851
    %v853 = vpop.f32.mrf.mxu0
    %v854 = vadd.f32 %v765, %v853
    %855 = vmatmul.bf16.gmra.mxu0 %v589
    %v856 = vpop.f32.mrf.mxu0
    %v857 = vadd.f32 %v768, %v856
    %v858 = vpop.f32.mrf.mxu0
    %v859 = vadd.f32 %v770, %v858
    %860 = vmatmul.bf16.gmra.mxu0 %v591
    %v861 = vpop.f32.mrf.mxu0
    %v862 = vadd.f32 %v773, %v861
    %v863 = vpop.f32.mrf.mxu0
    %v864 = vadd.f32 %v775, %v863
    %865 = vmatmul.bf16.gmra.mxu0 %v593
    %v866 = vpop.f32.mrf.mxu0
    %v867 = vadd.f32 %v778, %v866
    %v868 = vpop.f32.mrf.mxu0
    %v869 = vadd.f32 %v780, %v868
    %870 = vmatmul.bf16.gmra.mxu0 %v595
    %v871 = vpop.f32.mrf.mxu0
    %v872 = vadd.f32 %v783, %v871
    %v873 = vpop.f32.mrf.mxu0
    %v874 = vadd.f32 %v785, %v873
    %875 = vmatmul.bf16.gmra.mxu0 %v597
    %v876 = vpop.f32.mrf.mxu0
    %v877 = vadd.f32 %v788, %v876
    %v878 = vpop.f32.mrf.mxu0
    %v879 = vadd.f32 %v790, %v878
    %880 = vmatmul.bf16.gmra.mxu0 %v599
    %v881 = vpop.f32.mrf.mxu0
    %v882 = vadd.f32 %v793, %v881
    %v883 = vpop.f32.mrf.mxu0
    %v884 = vadd.f32 %v795, %v883
    %885 = vmatmul.bf16.gmra.mxu0 %v601
    %v886 = vpop.f32.mrf.mxu0
    %v887 = vadd.f32 %v798, %v886
    %v888 = vpop.f32.mrf.mxu0
    %v889 = vadd.f32 %v800, %v888
    %890 = vmatmul.bf16.gmra.mxu0 %v603
    %v891 = vpop.f32.mrf.mxu0
    %v892 = vadd.f32 %v803, %v891
    %v893 = vpop.f32.mrf.mxu0
    %v894 = vadd.f32 %v805, %v893
    %895 = vmatmul.bf16.gmra.mxu0 %v605
    %v896 = vpop.f32.mrf.mxu0
    %v897 = vadd.f32 %v808, %v896
    %v898 = vpop.f32.mrf.mxu0
    %v899 = vadd.f32 %v810, %v898
    %900 = vmatmul.bf16.gmra.mxu0 %v607
    %v901 = vpop.f32.mrf.mxu0
    %v902 = vadd.f32 %v813, %v901
    %v903 = vpop.f32.mrf.mxu0
    %v904 = vadd.f32 %v815, %v903
    %905 = vmatmul.bf16.gmra.mxu0 %v609
    %v906 = vpop.f32.mrf.mxu0
    %v907 = vadd.f32 %v818, %v906
    %v908 = vpop.f32.mrf.mxu0
    %v909 = vadd.f32 %v820, %v908
    %910 = vmatmul.bf16.gmra.mxu0 %v611
    %v911 = vpop.f32.mrf.mxu0
    %v912 = vadd.f32 %v823, %v911
    %v913 = vpop.f32.mrf.mxu0
    %v914 = vadd.f32 %v825, %v913
    %915 = vmatmul.bf16.gmra.mxu0 %v613
    %v916 = vpop.f32.mrf.mxu0
    %v917 = vadd.f32 %v828, %v916
    %v918 = vpop.f32.mrf.mxu0
    %v919 = vadd.f32 %v830, %v918
    %920 = vmatmul.bf16.gmra.mxu0 %v615
    %v921 = vpop.f32.mrf.mxu0
    %v922 = vadd.f32 %v833, %v921
    %v923 = vpop.f32.mrf.mxu0
    %v924 = vadd.f32 %v835, %v923
    %925 = vdwg.mxu0
    %v926 = vmax.f32 %v847, 0.0
    %v927 = vmax.f32 %v849, 0.0
    %v928 = vmax.f32 %v852, 0.0
    %v929 = vmax.f32 %v854, 0.0
    %v930 = vmax.f32 %v857, 0.0
    %v931 = vmax.f32 %v859, 0.0
    %v932 = vmax.f32 %v862, 0.0
    %v933 = vmax.f32 %v864, 0.0
    %v934 = vmax.f32 %v867, 0.0
    %v935 = vmax.f32 %v869, 0.0
    %v936 = vmax.f32 %v872, 0.0
    %v937 = vmax.f32 %v874, 0.0
    %v938 = vmax.f32 %v877, 0.0
    %v939 = vmax.f32 %v879, 0.0
    %v940 = vmax.f32 %v882, 0.0
    %v941 = vmax.f32 %v884, 0.0
    %v942 = vmax.f32 %v887, 0.0
    %v943 = vmax.f32 %v889, 0.0
    %v944 = vmax.f32 %v892, 0.0
    %v945 = vmax.f32 %v894, 0.0
    %v946 = vmax.f32 %v897, 0.0
    %v947 = vmax.f32 %v899, 0.0
    %v948 = vmax.f32 %v902, 0.0
    %v949 = vmax.f32 %v904, 0.0
    %v950 = vmax.f32 %v907, 0.0
    %v951 = vmax.f32 %v909, 0.0
    %v952 = vmax.f32 %v912, 0.0
    %v953 = vmax.f32 %v914, 0.0
    %v954 = vmax.f32 %v917, 0.0
    %v955 = vmax.f32 %v919, 0.0
    %v956 = vmax.f32 %v922, 0.0
    %v957 = vmax.f32 %v924, 0.0
    %v958 = vpack.c.bf16 %v927, %v926
    %v959 = vpack.c.bf16 %v929, %v928
    %v960 = vpack.c.bf16 %v931, %v930
    %v961 = vpack.c.bf16 %v933, %v932
    %v962 = vpack.c.bf16 %v935, %v934
    %v963 = vpack.c.bf16 %v937, %v936
    %v964 = vpack.c.bf16 %v939, %v938
    %v965 = vpack.c.bf16 %v941, %v940
    %v966 = vpack.c.bf16 %v943, %v942
    %v967 = vpack.c.bf16 %v945, %v944
    %v968 = vpack.c.bf16 %v947, %v946
    %v969 = vpack.c.bf16 %v949, %v948
    %v970 = vpack.c.bf16 %v951, %v950
    %v971 = vpack.c.bf16 %v953, %v952
    %v972 = vpack.c.bf16 %v955, %v954
    %v973 = vpack.c.bf16 %v957, %v956
    %v974 = vld [vmem:[#allocation7] sm:$0xf]
    %v975 = vld [vmem:[#allocation7 + $0x4] sm:$0xf]
    %v976 = vld [vmem:[#allocation7 + $0x8] sm:$0xf]
    %v977 = vld [vmem:[#allocation7 + $0xc] sm:$0xf]
    %v978 = vld [vmem:[#allocation7 + $0x10] sm:$0xf]
    %v979 = vld [vmem:[#allocation7 + $0x14] sm:$0xf]
    %v980 = vld [vmem:[#allocation7 + $0x18] sm:$0xf]
    %v981 = vld [vmem:[#allocation7 + $0x1c] sm:$0xf]
    %v982 = vld [vmem:[#allocation7 + $0x20] sm:$0xf]
    %v983 = vld [vmem:[#allocation7 + $0x24] sm:$0xf]
    %v984 = vld [vmem:[#allocation7 + $0x28] sm:$0xf]
    %v985 = vld [vmem:[#allocation7 + $0x2c] sm:$0xf]
    %v986 = vld [vmem:[#allocation7 + $0x30] sm:$0xf]
    %v987 = vld [vmem:[#allocation7 + $0x34] sm:$0xf]
    %v988 = vld [vmem:[#allocation7 + $0x38] sm:$0xf]
    %v989 = vld [vmem:[#allocation7 + $0x3c] sm:$0xf]
    %v990 = vld [vmem:[%s4] sm:$0x1]
    %v992 = vperm.slane %v990, 0
    %v1010 = vunpack.c.l.b16 %v974
    %v1011 = vunpack.c.l.b16 %v975
    %v1012 = vunpack.c.l.b16 %v976
    %v1013 = vunpack.c.l.b16 %v977
    %v1014 = vunpack.c.l.b16 %v978
    %v1015 = vunpack.c.l.b16 %v979
    %v1016 = vunpack.c.l.b16 %v980
    %v1017 = vunpack.c.l.b16 %v981
    %v1018 = vunpack.c.l.b16 %v982
    %v1019 = vunpack.c.l.b16 %v983
    %v1020 = vunpack.c.l.b16 %v984
    %v1021 = vunpack.c.l.b16 %v985
    %v1022 = vunpack.c.l.b16 %v986
    %v1023 = vunpack.c.l.b16 %v987
    %v1024 = vunpack.c.l.b16 %v988
    %v1025 = vunpack.c.l.b16 %v989
    %v1026 = vpack.c.b16 %v1011, %v1010
    %v1027 = vpack.c.b16 %v1013, %v1012
    %v1028 = vpack.c.b16 %v1015, %v1014
    %v1029 = vpack.c.b16 %v1017, %v1016
    %v1030 = vpack.c.b16 %v1019, %v1018
    %v1031 = vpack.c.b16 %v1021, %v1020
    %v1032 = vpack.c.b16 %v1023, %v1022
    %v1033 = vpack.c.b16 %v1025, %v1024
    %1042 = vmatpush.bf16.msra.mxu0 %v1033
    %1043 = vmatpush.bf16.msra.mxu0 %v1032
    %1044 = vmatpush.bf16.msra.mxu0 %v1031
    %1045 = vmatpush.bf16.msra.mxu0 %v1030
    %1046 = vmatpush.bf16.msra.mxu0 %v1029
    %1047 = vmatpush.bf16.msra.mxu0 %v1028
    %1048 = vmatpush.bf16.msra.mxu0 %v1027
    %1049 = vmatpush.bf16.msra.mxu0 %v1026
    %1050 = vmatmul.bf16.gmra.mxu0 %v958
    %v1051 = vpop.f32.mrf.mxu0
    %v1052 = vadd.f32 %v992, %v1051
    %v1053 = vpop.f32.mrf.mxu0
    %v1054 = vadd.f32 %v992, %v1053
    %1055 = vmatmul.bf16.gmra.mxu0 %v959
    %v1056 = vpop.f32.mrf.mxu0
    %v1057 = vadd.f32 %v992, %v1056
    %v1058 = vpop.f32.mrf.mxu0
    %v1059 = vadd.f32 %v992, %v1058
    %1060 = vmatmul.bf16.gmra.mxu0 %v960
    %v1061 = vpop.f32.mrf.mxu0
    %v1062 = vadd.f32 %v992, %v1061
    %v1063 = vpop.f32.mrf.mxu0
    %v1064 = vadd.f32 %v992, %v1063
    %1065 = vmatmul.bf16.gmra.mxu0 %v961
    %v1066 = vpop.f32.mrf.mxu0
    %v1067 = vadd.f32 %v992, %v1066
    %v1068 = vpop.f32.mrf.mxu0
    %v1069 = vadd.f32 %v992, %v1068
    %1070 = vmatmul.bf16.gmra.mxu0 %v962
    %v1071 = vpop.f32.mrf.mxu0
    %v1072 = vadd.f32 %v992, %v1071
    %v1073 = vpop.f32.mrf.mxu0
    %v1074 = vadd.f32 %v992, %v1073
    %1075 = vmatmul.bf16.gmra.mxu0 %v963
    %v1076 = vpop.f32.mrf.mxu0
    %v1077 = vadd.f32 %v992, %v1076
    %v1078 = vpop.f32.mrf.mxu0
    %v1079 = vadd.f32 %v992, %v1078
    %1080 = vmatmul.bf16.gmra.mxu0 %v964
    %v1081 = vpop.f32.mrf.mxu0
    %v1082 = vadd.f32 %v992, %v1081
    %v1083 = vpop.f32.mrf.mxu0
    %v1084 = vadd.f32 %v992, %v1083
    %1085 = vmatmul.bf16.gmra.mxu0 %v965
    %v1086 = vpop.f32.mrf.mxu0
    %v1087 = vadd.f32 %v992, %v1086
    %v1088 = vpop.f32.mrf.mxu0
    %v1089 = vadd.f32 %v992, %v1088
    %1090 = vmatmul.bf16.gmra.mxu0 %v966
    %v1091 = vpop.f32.mrf.mxu0
    %v1092 = vadd.f32 %v992, %v1091
    %v1093 = vpop.f32.mrf.mxu0
    %v1094 = vadd.f32 %v992, %v1093
    %1095 = vmatmul.bf16.gmra.mxu0 %v967
    %v1096 = vpop.f32.mrf.mxu0
    %v1097 = vadd.f32 %v992, %v1096
    %v1098 = vpop.f32.mrf.mxu0
    %v1099 = vadd.f32 %v992, %v1098
    %1100 = vmatmul.bf16.gmra.mxu0 %v968
    %v1101 = vpop.f32.mrf.mxu0
    %v1102 = vadd.f32 %v992, %v1101
    %v1103 = vpop.f32.mrf.mxu0
    %v1104 = vadd.f32 %v992, %v1103
    %1105 = vmatmul.bf16.gmra.mxu0 %v969
    %v1106 = vpop.f32.mrf.mxu0
    %v1107 = vadd.f32 %v992, %v1106
    %v1108 = vpop.f32.mrf.mxu0
    %v1109 = vadd.f32 %v992, %v1108
    %1110 = vmatmul.bf16.gmra.mxu0 %v970
    %v1111 = vpop.f32.mrf.mxu0
    %v1112 = vadd.f32 %v992, %v1111
    %v1113 = vpop.f32.mrf.mxu0
    %v1114 = vadd.f32 %v992, %v1113
    %1115 = vmatmul.bf16.gmra.mxu0 %v971
    %v1116 = vpop.f32.mrf.mxu0
    %v1117 = vadd.f32 %v992, %v1116
    %v1118 = vpop.f32.mrf.mxu0
    %v1119 = vadd.f32 %v992, %v1118
    %1120 = vmatmul.bf16.gmra.mxu0 %v972
    %v1121 = vpop.f32.mrf.mxu0
    %v1122 = vadd.f32 %v992, %v1121
    %v1123 = vpop.f32.mrf.mxu0
    %v1124 = vadd.f32 %v992, %v1123
    %1125 = vmatmul.bf16.gmra.mxu0 %v973
    %v1126 = vpop.f32.mrf.mxu0
    %v1127 = vadd.f32 %v992, %v1126
    %v1128 = vpop.f32.mrf.mxu0
    %v1129 = vadd.f32 %v992, %v1128
    %1130 = vdwg.mxu0
    %v1131 = vld [vmem:[#allocation8] sm:$0xf]
    %v1132 = vld [vmem:[#allocation8 + $0x4] sm:$0xf]
    %v1133 = vld [vmem:[#allocation8 + $0x8] sm:$0xf]
    %v1134 = vld [vmem:[#allocation8 + $0xc] sm:$0xf]
    %v1135 = vld [vmem:[#allocation8 + $0x10] sm:$0xf]
    %v1136 = vld [vmem:[#allocation8 + $0x14] sm:$0xf]
    %v1137 = vld [vmem:[#allocation8 + $0x18] sm:$0xf]
    %v1138 = vld [vmem:[#allocation8 + $0x1c] sm:$0xf]
    %v1139 = vld [vmem:[#allocation8 + $0x20] sm:$0xf]
    %v1140 = vld [vmem:[#allocation8 + $0x24] sm:$0xf]
    %v1141 = vld [vmem:[#allocation8 + $0x28] sm:$0xf]
    %v1142 = vld [vmem:[#allocation8 + $0x2c] sm:$0xf]
    %v1143 = vld [vmem:[#allocation8 + $0x30] sm:$0xf]
    %v1144 = vld [vmem:[#allocation8 + $0x34] sm:$0xf]
    %v1145 = vld [vmem:[#allocation8 + $0x38] sm:$0xf]
    %v1146 = vld [vmem:[#allocation8 + $0x3c] sm:$0xf]
    %v1147 = vld [vmem:[%s6] sm:$0x1]
    %v1149 = vperm.slane %v1147, 0
    %v1167 = vunpack.c.l.b16 %v1131
    %v1168 = vunpack.c.l.b16 %v1132
    %v1169 = vunpack.c.l.b16 %v1133
    %v1170 = vunpack.c.l.b16 %v1134
    %v1171 = vunpack.c.l.b16 %v1135
    %v1172 = vunpack.c.l.b16 %v1136
    %v1173 = vunpack.c.l.b16 %v1137
    %v1174 = vunpack.c.l.b16 %v1138
    %v1175 = vunpack.c.l.b16 %v1139
    %v1176 = vunpack.c.l.b16 %v1140
    %v1177 = vunpack.c.l.b16 %v1141
    %v1178 = vunpack.c.l.b16 %v1142
    %v1179 = vunpack.c.l.b16 %v1143
    %v1180 = vunpack.c.l.b16 %v1144
    %v1181 = vunpack.c.l.b16 %v1145
    %v1182 = vunpack.c.l.b16 %v1146
    %v1183 = vpack.c.b16 %v1168, %v1167
    %v1184 = vpack.c.b16 %v1170, %v1169
    %v1185 = vpack.c.b16 %v1172, %v1171
    %v1186 = vpack.c.b16 %v1174, %v1173
    %v1187 = vpack.c.b16 %v1176, %v1175
    %v1188 = vpack.c.b16 %v1178, %v1177
    %v1189 = vpack.c.b16 %v1180, %v1179
    %v1190 = vpack.c.b16 %v1182, %v1181
    %1199 = vmatpush.bf16.msra.mxu0 %v1190
    %1200 = vmatpush.bf16.msra.mxu0 %v1189
    %1201 = vmatpush.bf16.msra.mxu0 %v1188
    %1202 = vmatpush.bf16.msra.mxu0 %v1187
    %1203 = vmatpush.bf16.msra.mxu0 %v1186
    %1204 = vmatpush.bf16.msra.mxu0 %v1185
    %1205 = vmatpush.bf16.msra.mxu0 %v1184
    %1206 = vmatpush.bf16.msra.mxu0 %v1183
    %1207 = vmatmul.bf16.gmra.mxu0 %v958
    %v1208 = vpop.f32.mrf.mxu0
    %v1209 = vadd.f32 %v1149, %v1208
    %v1210 = vpop.f32.mrf.mxu0
    %v1211 = vadd.f32 %v1149, %v1210
    %1212 = vmatmul.bf16.gmra.mxu0 %v959
    %v1213 = vpop.f32.mrf.mxu0
    %v1214 = vadd.f32 %v1149, %v1213
    %v1215 = vpop.f32.mrf.mxu0
    %v1216 = vadd.f32 %v1149, %v1215
    %1217 = vmatmul.bf16.gmra.mxu0 %v960
    %v1218 = vpop.f32.mrf.mxu0
    %v1219 = vadd.f32 %v1149, %v1218
    %v1220 = vpop.f32.mrf.mxu0
    %v1221 = vadd.f32 %v1149, %v1220
    %1222 = vmatmul.bf16.gmra.mxu0 %v961
    %v1223 = vpop.f32.mrf.mxu0
    %v1224 = vadd.f32 %v1149, %v1223
    %v1225 = vpop.f32.mrf.mxu0
    %v1226 = vadd.f32 %v1149, %v1225
    %1227 = vmatmul.bf16.gmra.mxu0 %v962
    %v1228 = vpop.f32.mrf.mxu0
    %v1229 = vadd.f32 %v1149, %v1228
    %v1230 = vpop.f32.mrf.mxu0
    %v1231 = vadd.f32 %v1149, %v1230
    %1232 = vmatmul.bf16.gmra.mxu0 %v963
    %v1233 = vpop.f32.mrf.mxu0
    %v1234 = vadd.f32 %v1149, %v1233
    %v1235 = vpop.f32.mrf.mxu0
    %v1236 = vadd.f32 %v1149, %v1235
    %1237 = vmatmul.bf16.gmra.mxu0 %v964
    %v1238 = vpop.f32.mrf.mxu0
    %v1239 = vadd.f32 %v1149, %v1238
    %v1240 = vpop.f32.mrf.mxu0
    %v1241 = vadd.f32 %v1149, %v1240
    %1242 = vmatmul.bf16.gmra.mxu0 %v965
    %v1243 = vpop.f32.mrf.mxu0
    %v1244 = vadd.f32 %v1149, %v1243
    %v1245 = vpop.f32.mrf.mxu0
    %v1246 = vadd.f32 %v1149, %v1245
    %1247 = vmatmul.bf16.gmra.mxu0 %v966
    %v1248 = vpop.f32.mrf.mxu0
    %v1249 = vadd.f32 %v1149, %v1248
    %v1250 = vpop.f32.mrf.mxu0
    %v1251 = vadd.f32 %v1149, %v1250
    %1252 = vmatmul.bf16.gmra.mxu0 %v967
    %v1253 = vpop.f32.mrf.mxu0
    %v1254 = vadd.f32 %v1149, %v1253
    %v1255 = vpop.f32.mrf.mxu0
    %v1256 = vadd.f32 %v1149, %v1255
    %1257 = vmatmul.bf16.gmra.mxu0 %v968
    %v1258 = vpop.f32.mrf.mxu0
    %v1259 = vadd.f32 %v1149, %v1258
    %v1260 = vpop.f32.mrf.mxu0
    %v1261 = vadd.f32 %v1149, %v1260
    %1262 = vmatmul.bf16.gmra.mxu0 %v969
    %v1263 = vpop.f32.mrf.mxu0
    %v1264 = vadd.f32 %v1149, %v1263
    %v1265 = vpop.f32.mrf.mxu0
    %v1266 = vadd.f32 %v1149, %v1265
    %1267 = vmatmul.bf16.gmra.mxu0 %v970
    %v1268 = vpop.f32.mrf.mxu0
    %v1269 = vadd.f32 %v1149, %v1268
    %v1270 = vpop.f32.mrf.mxu0
    %v1271 = vadd.f32 %v1149, %v1270
    %1272 = vmatmul.bf16.gmra.mxu0 %v971
    %v1273 = vpop.f32.mrf.mxu0
    %v1274 = vadd.f32 %v1149, %v1273
    %v1275 = vpop.f32.mrf.mxu0
    %v1276 = vadd.f32 %v1149, %v1275
    %1277 = vmatmul.bf16.gmra.mxu0 %v972
    %v1278 = vpop.f32.mrf.mxu0
    %v1279 = vadd.f32 %v1149, %v1278
    %v1280 = vpop.f32.mrf.mxu0
    %v1281 = vadd.f32 %v1149, %v1280
    %1282 = vmatmul.bf16.gmra.mxu0 %v973
    %v1283 = vpop.f32.mrf.mxu0
    %v1284 = vadd.f32 %v1149, %v1283
    %v1285 = vpop.f32.mrf.mxu0
    %v1286 = vadd.f32 %v1149, %v1285
    %1287 = vdwg.mxu0
    %v1288 = vld [vmem:[#allocation10] sm:$0xff]
    %v1289 = vld [vmem:[#allocation10 + $0x8] sm:$0xff]
    %v1290 = vld [vmem:[#allocation10 + $0x10] sm:$0xff]
    %v1291 = vld [vmem:[#allocation10 + $0x18] sm:$0xff]
    %v1292 = vld [vmem:[#allocation10 + $0x20] sm:$0xff]
    %v1293 = vld [vmem:[#allocation10 + $0x28] sm:$0xff]
    %v1294 = vld [vmem:[#allocation10 + $0x30] sm:$0xff]
    %v1295 = vld [vmem:[#allocation10 + $0x38] sm:$0xff]
    %v1296 = vld [vmem:[#allocation10 + $0x40] sm:$0xff]
    %v1297 = vld [vmem:[#allocation10 + $0x48] sm:$0xff]
    %v1298 = vld [vmem:[#allocation10 + $0x50] sm:$0xff]
    %v1299 = vld [vmem:[#allocation10 + $0x58] sm:$0xff]
    %v1300 = vld [vmem:[#allocation10 + $0x60] sm:$0xff]
    %v1301 = vld [vmem:[#allocation10 + $0x68] sm:$0xff]
    %v1302 = vld [vmem:[#allocation10 + $0x70] sm:$0xff]
    %v1303 = vld [vmem:[#allocation10 + $0x78] sm:$0xff]
    %v1304 = vld [vmem:[#allocation10 + $0x80] sm:$0xff]
    %v1305 = vld [vmem:[#allocation10 + $0x88] sm:$0xff]
    %v1306 = vld [vmem:[#allocation10 + $0x90] sm:$0xff]
    %v1307 = vld [vmem:[#allocation10 + $0x98] sm:$0xff]
    %v1308 = vld [vmem:[#allocation10 + $0xa0] sm:$0xff]
    %v1309 = vld [vmem:[#allocation10 + $0xa8] sm:$0xff]
    %v1310 = vld [vmem:[#allocation10 + $0xb0] sm:$0xff]
    %v1311 = vld [vmem:[#allocation10 + $0xb8] sm:$0xff]
    %v1312 = vld [vmem:[#allocation10 + $0xc0] sm:$0xff]
    %v1313 = vld [vmem:[#allocation10 + $0xc8] sm:$0xff]
    %v1314 = vld [vmem:[#allocation10 + $0xd0] sm:$0xff]
    %v1315 = vld [vmem:[#allocation10 + $0xd8] sm:$0xff]
    %v1316 = vld [vmem:[#allocation10 + $0xe0] sm:$0xff]
    %v1317 = vld [vmem:[#allocation10 + $0xe8] sm:$0xff]
    %v1318 = vld [vmem:[#allocation10 + $0xf0] sm:$0xff]
    %v1319 = vld [vmem:[#allocation10 + $0xf8] sm:$0xff]
    %v1320 = vmul.f32 %v1209, 0.5
    %v1321 = vmul.f32 %v1211, 0.5
    %v1322 = vmul.f32 %v1214, 0.5
    %v1323 = vmul.f32 %v1216, 0.5
    %v1324 = vmul.f32 %v1219, 0.5
    %v1325 = vmul.f32 %v1221, 0.5
    %v1326 = vmul.f32 %v1224, 0.5
    %v1327 = vmul.f32 %v1226, 0.5
    %v1328 = vmul.f32 %v1229, 0.5
    %v1329 = vmul.f32 %v1231, 0.5
    %v1330 = vmul.f32 %v1234, 0.5
    %v1331 = vmul.f32 %v1236, 0.5
    %v1332 = vmul.f32 %v1239, 0.5
    %v1333 = vmul.f32 %v1241, 0.5
    %v1334 = vmul.f32 %v1244, 0.5
    %v1335 = vmul.f32 %v1246, 0.5
    %v1336 = vmul.f32 %v1249, 0.5
    %v1337 = vmul.f32 %v1251, 0.5
    %v1338 = vmul.f32 %v1254, 0.5
    %v1339 = vmul.f32 %v1256, 0.5
    %v1340 = vmul.f32 %v1259, 0.5
    %v1341 = vmul.f32 %v1261, 0.5
    %v1342 = vmul.f32 %v1264, 0.5
    %v1343 = vmul.f32 %v1266, 0.5
    %v1344 = vmul.f32 %v1269, 0.5
    %v1345 = vmul.f32 %v1271, 0.5
    %v1346 = vmul.f32 %v1274, 0.5
    %v1347 = vmul.f32 %v1276, 0.5
    %v1348 = vmul.f32 %v1279, 0.5
    %v1349 = vmul.f32 %v1281, 0.5
    %v1350 = vmul.f32 %v1284, 0.5
    %v1351 = vmul.f32 %v1286, 0.5
    %v1352 = vmul.f32 %v1320, 1.442695
    %v1353 = vpow.pop %v1352
    %v1354 = vmul.f32 %v1321, 1.442695
    %v1355 = vpow.pop %v1354
    %v1356 = vmul.f32 %v1322, 1.442695
    %v1357 = vpow.pop %v1356
    %v1358 = vmul.f32 %v1323, 1.442695
    %v1359 = vpow.pop %v1358
    %v1360 = vmul.f32 %v1324, 1.442695
    %v1361 = vpow.pop %v1360
    %v1362 = vmul.f32 %v1325, 1.442695
    %v1363 = vpow.pop %v1362
    %v1364 = vmul.f32 %v1326, 1.442695
    %v1365 = vpow.pop %v1364
    %v1366 = vmul.f32 %v1327, 1.442695
    %v1367 = vpow.pop %v1366
    %v1368 = vmul.f32 %v1328, 1.442695
    %v1369 = vpow.pop %v1368
    %v1370 = vmul.f32 %v1329, 1.442695
    %v1371 = vpow.pop %v1370
    %v1372 = vmul.f32 %v1330, 1.442695
    %v1373 = vpow.pop %v1372
    %v1374 = vmul.f32 %v1331, 1.442695
    %v1375 = vpow.pop %v1374
    %v1376 = vmul.f32 %v1332, 1.442695
    %v1377 = vpow.pop %v1376
    %v1378 = vmul.f32 %v1333, 1.442695
    %v1379 = vpow.pop %v1378
    %v1380 = vmul.f32 %v1334, 1.442695
    %v1381 = vpow.pop %v1380
    %v1382 = vmul.f32 %v1335, 1.442695
    %v1383 = vpow.pop %v1382
    %v1384 = vmul.f32 %v1336, 1.442695
    %v1385 = vpow.pop %v1384
    %v1386 = vmul.f32 %v1337, 1.442695
    %v1387 = vpow.pop %v1386
    %v1388 = vmul.f32 %v1338, 1.442695
    %v1389 = vpow.pop %v1388
    %v1390 = vmul.f32 %v1339, 1.442695
    %v1391 = vpow.pop %v1390
    %v1392 = vmul.f32 %v1340, 1.442695
    %v1393 = vpow.pop %v1392
    %v1394 = vmul.f32 %v1341, 1.442695
    %v1395 = vpow.pop %v1394
    %v1396 = vmul.f32 %v1342, 1.442695
    %v1397 = vpow.pop %v1396
    %v1398 = vmul.f32 %v1343, 1.442695
    %v1399 = vpow.pop %v1398
    %v1400 = vmul.f32 %v1344, 1.442695
    %v1401 = vpow.pop %v1400
    %v1402 = vmul.f32 %v1345, 1.442695
    %v1403 = vpow.pop %v1402
    %v1404 = vmul.f32 %v1346, 1.442695
    %v1405 = vpow.pop %v1404
    %v1406 = vmul.f32 %v1347, 1.442695
    %v1407 = vpow.pop %v1406
    %v1408 = vmul.f32 %v1348, 1.442695
    %v1409 = vpow.pop %v1408
    %v1410 = vmul.f32 %v1349, 1.442695
    %v1411 = vpow.pop %v1410
    %v1412 = vmul.f32 %v1350, 1.442695
    %v1413 = vpow.pop %v1412
    %v1414 = vmul.f32 %v1351, 1.442695
    %v1415 = vpow.pop %v1414
    %v1416 = vmul.f32 %v1288, %v1353
    %v1417 = vmul.f32 %v1289, %v1355
    %v1418 = vmul.f32 %v1290, %v1357
    %v1419 = vmul.f32 %v1291, %v1359
    %v1420 = vmul.f32 %v1292, %v1361
    %v1421 = vmul.f32 %v1293, %v1363
    %v1422 = vmul.f32 %v1294, %v1365
    %v1423 = vmul.f32 %v1295, %v1367
    %v1424 = vmul.f32 %v1296, %v1369
    %v1425 = vmul.f32 %v1297, %v1371
    %v1426 = vmul.f32 %v1298, %v1373
    %v1427 = vmul.f32 %v1299, %v1375
    %v1428 = vmul.f32 %v1300, %v1377
    %v1429 = vmul.f32 %v1301, %v1379
    %v1430 = vmul.f32 %v1302, %v1381
    %v1431 = vmul.f32 %v1303, %v1383
    %v1432 = vmul.f32 %v1304, %v1385
    %v1433 = vmul.f32 %v1305, %v1387
    %v1434 = vmul.f32 %v1306, %v1389
    %v1435 = vmul.f32 %v1307, %v1391
    %v1436 = vmul.f32 %v1308, %v1393
    %v1437 = vmul.f32 %v1309, %v1395
    %v1438 = vmul.f32 %v1310, %v1397
    %v1439 = vmul.f32 %v1311, %v1399
    %v1440 = vmul.f32 %v1312, %v1401
    %v1441 = vmul.f32 %v1313, %v1403
    %v1442 = vmul.f32 %v1314, %v1405
    %v1443 = vmul.f32 %v1315, %v1407
    %v1444 = vmul.f32 %v1316, %v1409
    %v1445 = vmul.f32 %v1317, %v1411
    %v1446 = vmul.f32 %v1318, %v1413
    %v1447 = vmul.f32 %v1319, %v1415
    %v1448 = vadd.f32 %v1052, %v1416
    %v1449 = vadd.f32 %v1054, %v1417
    %v1450 = vadd.f32 %v1057, %v1418
    %v1451 = vadd.f32 %v1059, %v1419
    %v1452 = vadd.f32 %v1062, %v1420
    %v1453 = vadd.f32 %v1064, %v1421
    %v1454 = vadd.f32 %v1067, %v1422
    %v1455 = vadd.f32 %v1069, %v1423
    %v1456 = vadd.f32 %v1072, %v1424
    %v1457 = vadd.f32 %v1074, %v1425
    %v1458 = vadd.f32 %v1077, %v1426
    %v1459 = vadd.f32 %v1079, %v1427
    %v1460 = vadd.f32 %v1082, %v1428
    %v1461 = vadd.f32 %v1084, %v1429
    %v1462 = vadd.f32 %v1087, %v1430
    %v1463 = vadd.f32 %v1089, %v1431
    %v1464 = vadd.f32 %v1092, %v1432
    %v1465 = vadd.f32 %v1094, %v1433
    %v1466 = vadd.f32 %v1097, %v1434
    %v1467 = vadd.f32 %v1099, %v1435
    %v1468 = vadd.f32 %v1102, %v1436
    %v1469 = vadd.f32 %v1104, %v1437
    %v1470 = vadd.f32 %v1107, %v1438
    %v1471 = vadd.f32 %v1109, %v1439
    %v1472 = vadd.f32 %v1112, %v1440
    %v1473 = vadd.f32 %v1114, %v1441
    %v1474 = vadd.f32 %v1117, %v1442
    %v1475 = vadd.f32 %v1119, %v1443
    %v1476 = vadd.f32 %v1122, %v1444
    %v1477 = vadd.f32 %v1124, %v1445
    %v1478 = vadd.f32 %v1127, %v1446
    %v1479 = vadd.f32 %v1129, %v1447
    %1480 = vst [vmem:[#allocation11] sm:$0xff] %v1448
    %1481 = vst [vmem:[#allocation11 + $0x8] sm:$0xff] %v1449
    %1482 = vst [vmem:[#allocation11 + $0x10] sm:$0xff] %v1450
    %1483 = vst [vmem:[#allocation11 + $0x18] sm:$0xff] %v1451
    %1484 = vst [vmem:[#allocation11 + $0x20] sm:$0xff] %v1452
    %1485 = vst [vmem:[#allocation11 + $0x28] sm:$0xff] %v1453
    %1486 = vst [vmem:[#allocation11 + $0x30] sm:$0xff] %v1454
    %1487 = vst [vmem:[#allocation11 + $0x38] sm:$0xff] %v1455
    %1488 = vst [vmem:[#allocation11 + $0x40] sm:$0xff] %v1456
    %1489 = vst [vmem:[#allocation11 + $0x48] sm:$0xff] %v1457
    %1490 = vst [vmem:[#allocation11 + $0x50] sm:$0xff] %v1458
    %1491 = vst [vmem:[#allocation11 + $0x58] sm:$0xff] %v1459
    %1492 = vst [vmem:[#allocation11 + $0x60] sm:$0xff] %v1460
    %1493 = vst [vmem:[#allocation11 + $0x68] sm:$0xff] %v1461
    %1494 = vst [vmem:[#allocation11 + $0x70] sm:$0xff] %v1462
    %1495 = vst [vmem:[#allocation11 + $0x78] sm:$0xff] %v1463
    %1496 = vst [vmem:[#allocation11 + $0x80] sm:$0xff] %v1464
    %1497 = vst [vmem:[#allocation11 + $0x88] sm:$0xff] %v1465
    %1498 = vst [vmem:[#allocation11 + $0x90] sm:$0xff] %v1466
    %1499 = vst [vmem:[#allocation11 + $0x98] sm:$0xff] %v1467
    %1500 = vst [vmem:[#allocation11 + $0xa0] sm:$0xff] %v1468
    %1501 = vst [vmem:[#allocation11 + $0xa8] sm:$0xff] %v1469
    %1502 = vst [vmem:[#allocation11 + $0xb0] sm:$0xff] %v1470
    %1503 = vst [vmem:[#allocation11 + $0xb8] sm:$0xff] %v1471
    %1504 = vst [vmem:[#allocation11 + $0xc0] sm:$0xff] %v1472
    %1505 = vst [vmem:[#allocation11 + $0xc8] sm:$0xff] %v1473
    %1506 = vst [vmem:[#allocation11 + $0xd0] sm:$0xff] %v1474
    %1507 = vst [vmem:[#allocation11 + $0xd8] sm:$0xff] %v1475
    %1508 = vst [vmem:[#allocation11 + $0xe0] sm:$0xff] %v1476
    %1509 = vst [vmem:[#allocation11 + $0xe8] sm:$0xff] %v1477
    %1510 = vst [vmem:[#allocation11 + $0xf0] sm:$0xff] %v1478
    %1511 = vst [vmem:[#allocation11 + $0xf8] sm:$0xff] %v1479
    %v1512 = vmul.f32 %v1448, %v1448
    %v1513 = vmul.f32 %v1449, %v1449
    %v1514 = vmul.f32 %v1450, %v1450
    %v1515 = vmul.f32 %v1451, %v1451
    %v1516 = vmul.f32 %v1452, %v1452
    %v1517 = vmul.f32 %v1453, %v1453
    %v1518 = vmul.f32 %v1454, %v1454
    %v1519 = vmul.f32 %v1455, %v1455
    %v1520 = vmul.f32 %v1456, %v1456
    %v1521 = vmul.f32 %v1457, %v1457
    %v1522 = vmul.f32 %v1458, %v1458
    %v1523 = vmul.f32 %v1459, %v1459
    %v1524 = vmul.f32 %v1460, %v1460
    %v1525 = vmul.f32 %v1461, %v1461
    %v1526 = vmul.f32 %v1462, %v1462
    %v1527 = vmul.f32 %v1463, %v1463
    %v1528 = vmul.f32 %v1464, %v1464
    %v1529 = vmul.f32 %v1465, %v1465
    %v1530 = vmul.f32 %v1466, %v1466
    %v1531 = vmul.f32 %v1467, %v1467
    %v1532 = vmul.f32 %v1468, %v1468
    %v1533 = vmul.f32 %v1469, %v1469
    %v1534 = vmul.f32 %v1470, %v1470
    %v1535 = vmul.f32 %v1471, %v1471
    %v1536 = vmul.f32 %v1472, %v1472
    %v1537 = vmul.f32 %v1473, %v1473
    %v1538 = vmul.f32 %v1474, %v1474
    %v1539 = vmul.f32 %v1475, %v1475
    %v1540 = vmul.f32 %v1476, %v1476
    %v1541 = vmul.f32 %v1477, %v1477
    %v1542 = vmul.f32 %v1478, %v1478
    %v1543 = vmul.f32 %v1479, %v1479
    %1544 = vadd.xlane.f32.xlu0 %v1512
    %v1545 = vpop.xlane.xlu0 %1544
    %1546 = vadd.xlane.f32.xlu0 %v1513
    %v1547 = vpop.xlane.xlu0 %1546
    %1548 = vadd.xlane.f32.xlu0 %v1514
    %v1549 = vpop.xlane.xlu0 %1548
    %1550 = vadd.xlane.f32.xlu0 %v1515
    %v1551 = vpop.xlane.xlu0 %1550
    %1552 = vadd.xlane.f32.xlu0 %v1516
    %v1553 = vpop.xlane.xlu0 %1552
    %1554 = vadd.xlane.f32.xlu0 %v1517
    %v1555 = vpop.xlane.xlu0 %1554
    %1556 = vadd.xlane.f32.xlu0 %v1518
    %v1557 = vpop.xlane.xlu0 %1556
    %1558 = vadd.xlane.f32.xlu0 %v1519
    %v1559 = vpop.xlane.xlu0 %1558
    %1560 = vadd.xlane.f32.xlu0 %v1520
    %v1561 = vpop.xlane.xlu0 %1560
    %1562 = vadd.xlane.f32.xlu0 %v1521
    %v1563 = vpop.xlane.xlu0 %1562
    %1564 = vadd.xlane.f32.xlu0 %v1522
    %v1565 = vpop.xlane.xlu0 %1564
    %1566 = vadd.xlane.f32.xlu0 %v1523
    %v1567 = vpop.xlane.xlu0 %1566
    %1568 = vadd.xlane.f32.xlu0 %v1524
    %v1569 = vpop.xlane.xlu0 %1568
    %1570 = vadd.xlane.f32.xlu0 %v1525
    %v1571 = vpop.xlane.xlu0 %1570
    %1572 = vadd.xlane.f32.xlu0 %v1526
    %v1573 = vpop.xlane.xlu0 %1572
    %1574 = vadd.xlane.f32.xlu0 %v1527
    %v1575 = vpop.xlane.xlu0 %1574
    %1576 = vadd.xlane.f32.xlu0 %v1528
    %v1577 = vpop.xlane.xlu0 %1576
    %1578 = vadd.xlane.f32.xlu0 %v1529
    %v1579 = vpop.xlane.xlu0 %1578
    %1580 = vadd.xlane.f32.xlu0 %v1530
    %v1581 = vpop.xlane.xlu0 %1580
    %1582 = vadd.xlane.f32.xlu0 %v1531
    %v1583 = vpop.xlane.xlu0 %1582
    %1584 = vadd.xlane.f32.xlu0 %v1532
    %v1585 = vpop.xlane.xlu0 %1584
    %1586 = vadd.xlane.f32.xlu0 %v1533
    %v1587 = vpop.xlane.xlu0 %1586
    %1588 = vadd.xlane.f32.xlu0 %v1534
    %v1589 = vpop.xlane.xlu0 %1588
    %1590 = vadd.xlane.f32.xlu0 %v1535
    %v1591 = vpop.xlane.xlu0 %1590
    %1592 = vadd.xlane.f32.xlu0 %v1536
    %v1593 = vpop.xlane.xlu0 %1592
    %1594 = vadd.xlane.f32.xlu0 %v1537
    %v1595 = vpop.xlane.xlu0 %1594
    %1596 = vadd.xlane.f32.xlu0 %v1538
    %v1597 = vpop.xlane.xlu0 %1596
    %1598 = vadd.xlane.f32.xlu0 %v1539
    %v1599 = vpop.xlane.xlu0 %1598
    %1600 = vadd.xlane.f32.xlu0 %v1540
    %v1601 = vpop.xlane.xlu0 %1600
    %1602 = vadd.xlane.f32.xlu0 %v1541
    %v1603 = vpop.xlane.xlu0 %1602
    %1604 = vadd.xlane.f32.xlu0 %v1542
    %v1605 = vpop.xlane.xlu0 %1604
    %1606 = vadd.xlane.f32.xlu0 %v1543
    %v1607 = vpop.xlane.xlu0 %1606
    %v1608 = vmax.f32 %v1545, 1e-16
    %v1609 = vmax.f32 %v1547, 1e-16
    %v1610 = vmax.f32 %v1549, 1e-16
    %v1611 = vmax.f32 %v1551, 1e-16
    %v1612 = vmax.f32 %v1553, 1e-16
    %v1613 = vmax.f32 %v1555, 1e-16
    %v1614 = vmax.f32 %v1557, 1e-16
    %v1615 = vmax.f32 %v1559, 1e-16
    %v1616 = vmax.f32 %v1561, 1e-16
    %v1617 = vmax.f32 %v1563, 1e-16
    %v1618 = vmax.f32 %v1565, 1e-16
    %v1619 = vmax.f32 %v1567, 1e-16
    %v1620 = vmax.f32 %v1569, 1e-16
    %v1621 = vmax.f32 %v1571, 1e-16
    %v1622 = vmax.f32 %v1573, 1e-16
    %v1623 = vmax.f32 %v1575, 1e-16
    %v1624 = vmax.f32 %v1577, 1e-16
    %v1625 = vmax.f32 %v1579, 1e-16
    %v1626 = vmax.f32 %v1581, 1e-16
    %v1627 = vmax.f32 %v1583, 1e-16
    %v1628 = vmax.f32 %v1585, 1e-16
    %v1629 = vmax.f32 %v1587, 1e-16
    %v1630 = vmax.f32 %v1589, 1e-16
    %v1631 = vmax.f32 %v1591, 1e-16
    %v1632 = vmax.f32 %v1593, 1e-16
    %v1633 = vmax.f32 %v1595, 1e-16
    %v1634 = vmax.f32 %v1597, 1e-16
    %v1635 = vmax.f32 %v1599, 1e-16
    %v1636 = vmax.f32 %v1601, 1e-16
    %v1637 = vmax.f32 %v1603, 1e-16
    %v1638 = vmax.f32 %v1605, 1e-16
    %v1639 = vmax.f32 %v1607, 1e-16
    %v1640 = vrsqrt.pop %v1608
    %v1641 = vmul.f32 %v1640, %v1608
    %v1642 = vmul.f32 %v1641, %v1640
    %v1643 = vmul.f32 0.5, %v1642
    %v1644 = vsub.f32 1.5, %v1643
    %v1645 = vmul.f32 %v1640, %v1644
    %vm1646 = vweird.f32 %v1608
    %vm1647 = vweird.f32 %v1640
    %vm1648 = vmor %vm1646, %vm1647
    %v1649 = vsel %vm1648, %v1640, %v1645
    %v1650 = vrsqrt.pop %v1609
    %v1651 = vmul.f32 %v1650, %v1609
    %v1652 = vmul.f32 %v1651, %v1650
    %v1653 = vmul.f32 0.5, %v1652
    %v1654 = vsub.f32 1.5, %v1653
    %v1655 = vmul.f32 %v1650, %v1654
    %vm1656 = vweird.f32 %v1609
    %vm1657 = vweird.f32 %v1650
    %vm1658 = vmor %vm1656, %vm1657
    %v1659 = vsel %vm1658, %v1650, %v1655
    %v1660 = vrsqrt.pop %v1610
    %v1661 = vmul.f32 %v1660, %v1610
    %v1662 = vmul.f32 %v1661, %v1660
    %v1663 = vmul.f32 0.5, %v1662
    %v1664 = vsub.f32 1.5, %v1663
    %v1665 = vmul.f32 %v1660, %v1664
    %vm1666 = vweird.f32 %v1610
    %vm1667 = vweird.f32 %v1660
    %vm1668 = vmor %vm1666, %vm1667
    %v1669 = vsel %vm1668, %v1660, %v1665
    %v1670 = vrsqrt.pop %v1611
    %v1671 = vmul.f32 %v1670, %v1611
    %v1672 = vmul.f32 %v1671, %v1670
    %v1673 = vmul.f32 0.5, %v1672
    %v1674 = vsub.f32 1.5, %v1673
    %v1675 = vmul.f32 %v1670, %v1674
    %vm1676 = vweird.f32 %v1611
    %vm1677 = vweird.f32 %v1670
    %vm1678 = vmor %vm1676, %vm1677
    %v1679 = vsel %vm1678, %v1670, %v1675
    %v1680 = vrsqrt.pop %v1612
    %v1681 = vmul.f32 %v1680, %v1612
    %v1682 = vmul.f32 %v1681, %v1680
    %v1683 = vmul.f32 0.5, %v1682
    %v1684 = vsub.f32 1.5, %v1683
    %v1685 = vmul.f32 %v1680, %v1684
    %vm1686 = vweird.f32 %v1612
    %vm1687 = vweird.f32 %v1680
    %vm1688 = vmor %vm1686, %vm1687
    %v1689 = vsel %vm1688, %v1680, %v1685
    %v1690 = vrsqrt.pop %v1613
    %v1691 = vmul.f32 %v1690, %v1613
    %v1692 = vmul.f32 %v1691, %v1690
    %v1693 = vmul.f32 0.5, %v1692
    %v1694 = vsub.f32 1.5, %v1693
    %v1695 = vmul.f32 %v1690, %v1694
    %vm1696 = vweird.f32 %v1613
    %vm1697 = vweird.f32 %v1690
    %vm1698 = vmor %vm1696, %vm1697
    %v1699 = vsel %vm1698, %v1690, %v1695
    %v1700 = vrsqrt.pop %v1614
    %v1701 = vmul.f32 %v1700, %v1614
    %v1702 = vmul.f32 %v1701, %v1700
    %v1703 = vmul.f32 0.5, %v1702
    %v1704 = vsub.f32 1.5, %v1703
    %v1705 = vmul.f32 %v1700, %v1704
    %vm1706 = vweird.f32 %v1614
    %vm1707 = vweird.f32 %v1700
    %vm1708 = vmor %vm1706, %vm1707
    %v1709 = vsel %vm1708, %v1700, %v1705
    %v1710 = vrsqrt.pop %v1615
    %v1711 = vmul.f32 %v1710, %v1615
    %v1712 = vmul.f32 %v1711, %v1710
    %v1713 = vmul.f32 0.5, %v1712
    %v1714 = vsub.f32 1.5, %v1713
    %v1715 = vmul.f32 %v1710, %v1714
    %vm1716 = vweird.f32 %v1615
    %vm1717 = vweird.f32 %v1710
    %vm1718 = vmor %vm1716, %vm1717
    %v1719 = vsel %vm1718, %v1710, %v1715
    %v1720 = vrsqrt.pop %v1616
    %v1721 = vmul.f32 %v1720, %v1616
    %v1722 = vmul.f32 %v1721, %v1720
    %v1723 = vmul.f32 0.5, %v1722
    %v1724 = vsub.f32 1.5, %v1723
    %v1725 = vmul.f32 %v1720, %v1724
    %vm1726 = vweird.f32 %v1616
    %vm1727 = vweird.f32 %v1720
    %vm1728 = vmor %vm1726, %vm1727
    %v1729 = vsel %vm1728, %v1720, %v1725
    %v1730 = vrsqrt.pop %v1617
    %v1731 = vmul.f32 %v1730, %v1617
    %v1732 = vmul.f32 %v1731, %v1730
    %v1733 = vmul.f32 0.5, %v1732
    %v1734 = vsub.f32 1.5, %v1733
    %v1735 = vmul.f32 %v1730, %v1734
    %vm1736 = vweird.f32 %v1617
    %vm1737 = vweird.f32 %v1730
    %vm1738 = vmor %vm1736, %vm1737
    %v1739 = vsel %vm1738, %v1730, %v1735
    %v1740 = vrsqrt.pop %v1618
    %v1741 = vmul.f32 %v1740, %v1618
    %v1742 = vmul.f32 %v1741, %v1740
    %v1743 = vmul.f32 0.5, %v1742
    %v1744 = vsub.f32 1.5, %v1743
    %v1745 = vmul.f32 %v1740, %v1744
    %vm1746 = vweird.f32 %v1618
    %vm1747 = vweird.f32 %v1740
    %vm1748 = vmor %vm1746, %vm1747
    %v1749 = vsel %vm1748, %v1740, %v1745
    %v1750 = vrsqrt.pop %v1619
    %v1751 = vmul.f32 %v1750, %v1619
    %v1752 = vmul.f32 %v1751, %v1750
    %v1753 = vmul.f32 0.5, %v1752
    %v1754 = vsub.f32 1.5, %v1753
    %v1755 = vmul.f32 %v1750, %v1754
    %vm1756 = vweird.f32 %v1619
    %vm1757 = vweird.f32 %v1750
    %vm1758 = vmor %vm1756, %vm1757
    %v1759 = vsel %vm1758, %v1750, %v1755
    %v1760 = vrsqrt.pop %v1620
    %v1761 = vmul.f32 %v1760, %v1620
    %v1762 = vmul.f32 %v1761, %v1760
    %v1763 = vmul.f32 0.5, %v1762
    %v1764 = vsub.f32 1.5, %v1763
    %v1765 = vmul.f32 %v1760, %v1764
    %vm1766 = vweird.f32 %v1620
    %vm1767 = vweird.f32 %v1760
    %vm1768 = vmor %vm1766, %vm1767
    %v1769 = vsel %vm1768, %v1760, %v1765
    %v1770 = vrsqrt.pop %v1621
    %v1771 = vmul.f32 %v1770, %v1621
    %v1772 = vmul.f32 %v1771, %v1770
    %v1773 = vmul.f32 0.5, %v1772
    %v1774 = vsub.f32 1.5, %v1773
    %v1775 = vmul.f32 %v1770, %v1774
    %vm1776 = vweird.f32 %v1621
    %vm1777 = vweird.f32 %v1770
    %vm1778 = vmor %vm1776, %vm1777
    %v1779 = vsel %vm1778, %v1770, %v1775
    %v1780 = vrsqrt.pop %v1622
    %v1781 = vmul.f32 %v1780, %v1622
    %v1782 = vmul.f32 %v1781, %v1780
    %v1783 = vmul.f32 0.5, %v1782
    %v1784 = vsub.f32 1.5, %v1783
    %v1785 = vmul.f32 %v1780, %v1784
    %vm1786 = vweird.f32 %v1622
    %vm1787 = vweird.f32 %v1780
    %vm1788 = vmor %vm1786, %vm1787
    %v1789 = vsel %vm1788, %v1780, %v1785
    %v1790 = vrsqrt.pop %v1623
    %v1791 = vmul.f32 %v1790, %v1623
    %v1792 = vmul.f32 %v1791, %v1790
    %v1793 = vmul.f32 0.5, %v1792
    %v1794 = vsub.f32 1.5, %v1793
    %v1795 = vmul.f32 %v1790, %v1794
    %vm1796 = vweird.f32 %v1623
    %vm1797 = vweird.f32 %v1790
    %vm1798 = vmor %vm1796, %vm1797
    %v1799 = vsel %vm1798, %v1790, %v1795
    %v1800 = vrsqrt.pop %v1624
    %v1801 = vmul.f32 %v1800, %v1624
    %v1802 = vmul.f32 %v1801, %v1800
    %v1803 = vmul.f32 0.5, %v1802
    %v1804 = vsub.f32 1.5, %v1803
    %v1805 = vmul.f32 %v1800, %v1804
    %vm1806 = vweird.f32 %v1624
    %vm1807 = vweird.f32 %v1800
    %vm1808 = vmor %vm1806, %vm1807
    %v1809 = vsel %vm1808, %v1800, %v1805
    %v1810 = vrsqrt.pop %v1625
    %v1811 = vmul.f32 %v1810, %v1625
    %v1812 = vmul.f32 %v1811, %v1810
    %v1813 = vmul.f32 0.5, %v1812
    %v1814 = vsub.f32 1.5, %v1813
    %v1815 = vmul.f32 %v1810, %v1814
    %vm1816 = vweird.f32 %v1625
    %vm1817 = vweird.f32 %v1810
    %vm1818 = vmor %vm1816, %vm1817
    %v1819 = vsel %vm1818, %v1810, %v1815
    %v1820 = vrsqrt.pop %v1626
    %v1821 = vmul.f32 %v1820, %v1626
    %v1822 = vmul.f32 %v1821, %v1820
    %v1823 = vmul.f32 0.5, %v1822
    %v1824 = vsub.f32 1.5, %v1823
    %v1825 = vmul.f32 %v1820, %v1824
    %vm1826 = vweird.f32 %v1626
    %vm1827 = vweird.f32 %v1820
    %vm1828 = vmor %vm1826, %vm1827
    %v1829 = vsel %vm1828, %v1820, %v1825
    %v1830 = vrsqrt.pop %v1627
    %v1831 = vmul.f32 %v1830, %v1627
    %v1832 = vmul.f32 %v1831, %v1830
    %v1833 = vmul.f32 0.5, %v1832
    %v1834 = vsub.f32 1.5, %v1833
    %v1835 = vmul.f32 %v1830, %v1834
    %vm1836 = vweird.f32 %v1627
    %vm1837 = vweird.f32 %v1830
    %vm1838 = vmor %vm1836, %vm1837
    %v1839 = vsel %vm1838, %v1830, %v1835
    %v1840 = vrsqrt.pop %v1628
    %v1841 = vmul.f32 %v1840, %v1628
    %v1842 = vmul.f32 %v1841, %v1840
    %v1843 = vmul.f32 0.5, %v1842
    %v1844 = vsub.f32 1.5, %v1843
    %v1845 = vmul.f32 %v1840, %v1844
    %vm1846 = vweird.f32 %v1628
    %vm1847 = vweird.f32 %v1840
    %vm1848 = vmor %vm1846, %vm1847
    %v1849 = vsel %vm1848, %v1840, %v1845
    %v1850 = vrsqrt.pop %v1629
    %v1851 = vmul.f32 %v1850, %v1629
    %v1852 = vmul.f32 %v1851, %v1850
    %v1853 = vmul.f32 0.5, %v1852
    %v1854 = vsub.f32 1.5, %v1853
    %v1855 = vmul.f32 %v1850, %v1854
    %vm1856 = vweird.f32 %v1629
    %vm1857 = vweird.f32 %v1850
    %vm1858 = vmor %vm1856, %vm1857
    %v1859 = vsel %vm1858, %v1850, %v1855
    %v1860 = vrsqrt.pop %v1630
    %v1861 = vmul.f32 %v1860, %v1630
    %v1862 = vmul.f32 %v1861, %v1860
    %v1863 = vmul.f32 0.5, %v1862
    %v1864 = vsub.f32 1.5, %v1863
    %v1865 = vmul.f32 %v1860, %v1864
    %vm1866 = vweird.f32 %v1630
    %vm1867 = vweird.f32 %v1860
    %vm1868 = vmor %vm1866, %vm1867
    %v1869 = vsel %vm1868, %v1860, %v1865
    %v1870 = vrsqrt.pop %v1631
    %v1871 = vmul.f32 %v1870, %v1631
    %v1872 = vmul.f32 %v1871, %v1870
    %v1873 = vmul.f32 0.5, %v1872
    %v1874 = vsub.f32 1.5, %v1873
    %v1875 = vmul.f32 %v1870, %v1874
    %vm1876 = vweird.f32 %v1631
    %vm1877 = vweird.f32 %v1870
    %vm1878 = vmor %vm1876, %vm1877
    %v1879 = vsel %vm1878, %v1870, %v1875
    %v1880 = vrsqrt.pop %v1632
    %v1881 = vmul.f32 %v1880, %v1632
    %v1882 = vmul.f32 %v1881, %v1880
    %v1883 = vmul.f32 0.5, %v1882
    %v1884 = vsub.f32 1.5, %v1883
    %v1885 = vmul.f32 %v1880, %v1884
    %vm1886 = vweird.f32 %v1632
    %vm1887 = vweird.f32 %v1880
    %vm1888 = vmor %vm1886, %vm1887
    %v1889 = vsel %vm1888, %v1880, %v1885
    %v1890 = vrsqrt.pop %v1633
    %v1891 = vmul.f32 %v1890, %v1633
    %v1892 = vmul.f32 %v1891, %v1890
    %v1893 = vmul.f32 0.5, %v1892
    %v1894 = vsub.f32 1.5, %v1893
    %v1895 = vmul.f32 %v1890, %v1894
    %vm1896 = vweird.f32 %v1633
    %vm1897 = vweird.f32 %v1890
    %vm1898 = vmor %vm1896, %vm1897
    %v1899 = vsel %vm1898, %v1890, %v1895
    %v1900 = vrsqrt.pop %v1634
    %v1901 = vmul.f32 %v1900, %v1634
    %v1902 = vmul.f32 %v1901, %v1900
    %v1903 = vmul.f32 0.5, %v1902
    %v1904 = vsub.f32 1.5, %v1903
    %v1905 = vmul.f32 %v1900, %v1904
    %vm1906 = vweird.f32 %v1634
    %vm1907 = vweird.f32 %v1900
    %vm1908 = vmor %vm1906, %vm1907
    %v1909 = vsel %vm1908, %v1900, %v1905
    %v1910 = vrsqrt.pop %v1635
    %v1911 = vmul.f32 %v1910, %v1635
    %v1912 = vmul.f32 %v1911, %v1910
    %v1913 = vmul.f32 0.5, %v1912
    %v1914 = vsub.f32 1.5, %v1913
    %v1915 = vmul.f32 %v1910, %v1914
    %vm1916 = vweird.f32 %v1635
    %vm1917 = vweird.f32 %v1910
    %vm1918 = vmor %vm1916, %vm1917
    %v1919 = vsel %vm1918, %v1910, %v1915
    %v1920 = vrsqrt.pop %v1636
    %v1921 = vmul.f32 %v1920, %v1636
    %v1922 = vmul.f32 %v1921, %v1920
    %v1923 = vmul.f32 0.5, %v1922
    %v1924 = vsub.f32 1.5, %v1923
    %v1925 = vmul.f32 %v1920, %v1924
    %vm1926 = vweird.f32 %v1636
    %vm1927 = vweird.f32 %v1920
    %vm1928 = vmor %vm1926, %vm1927
    %v1929 = vsel %vm1928, %v1920, %v1925
    %v1930 = vrsqrt.pop %v1637
    %v1931 = vmul.f32 %v1930, %v1637
    %v1932 = vmul.f32 %v1931, %v1930
    %v1933 = vmul.f32 0.5, %v1932
    %v1934 = vsub.f32 1.5, %v1933
    %v1935 = vmul.f32 %v1930, %v1934
    %vm1936 = vweird.f32 %v1637
    %vm1937 = vweird.f32 %v1930
    %vm1938 = vmor %vm1936, %vm1937
    %v1939 = vsel %vm1938, %v1930, %v1935
    %v1940 = vrsqrt.pop %v1638
    %v1941 = vmul.f32 %v1940, %v1638
    %v1942 = vmul.f32 %v1941, %v1940
    %v1943 = vmul.f32 0.5, %v1942
    %v1944 = vsub.f32 1.5, %v1943
    %v1945 = vmul.f32 %v1940, %v1944
    %vm1946 = vweird.f32 %v1638
    %vm1947 = vweird.f32 %v1940
    %vm1948 = vmor %vm1946, %vm1947
    %v1949 = vsel %vm1948, %v1940, %v1945
    %v1950 = vrsqrt.pop %v1639
    %v1951 = vmul.f32 %v1950, %v1639
    %v1952 = vmul.f32 %v1951, %v1950
    %v1953 = vmul.f32 0.5, %v1952
    %v1954 = vsub.f32 1.5, %v1953
    %v1955 = vmul.f32 %v1950, %v1954
    %vm1956 = vweird.f32 %v1639
    %vm1957 = vweird.f32 %v1950
    %vm1958 = vmor %vm1956, %vm1957
    %v1959 = vsel %vm1958, %v1950, %v1955
    %v1960 = vmul.f32 %v1448, %v1649
    %v1961 = vmul.f32 %v1449, %v1659
    %v1962 = vmul.f32 %v1450, %v1669
    %v1963 = vmul.f32 %v1451, %v1679
    %v1964 = vmul.f32 %v1452, %v1689
    %v1965 = vmul.f32 %v1453, %v1699
    %v1966 = vmul.f32 %v1454, %v1709
    %v1967 = vmul.f32 %v1455, %v1719
    %v1968 = vmul.f32 %v1456, %v1729
    %v1969 = vmul.f32 %v1457, %v1739
    %v1970 = vmul.f32 %v1458, %v1749
    %v1971 = vmul.f32 %v1459, %v1759
    %v1972 = vmul.f32 %v1460, %v1769
    %v1973 = vmul.f32 %v1461, %v1779
    %v1974 = vmul.f32 %v1462, %v1789
    %v1975 = vmul.f32 %v1463, %v1799
    %v1976 = vmul.f32 %v1464, %v1809
    %v1977 = vmul.f32 %v1465, %v1819
    %v1978 = vmul.f32 %v1466, %v1829
    %v1979 = vmul.f32 %v1467, %v1839
    %v1980 = vmul.f32 %v1468, %v1849
    %v1981 = vmul.f32 %v1469, %v1859
    %v1982 = vmul.f32 %v1470, %v1869
    %v1983 = vmul.f32 %v1471, %v1879
    %v1984 = vmul.f32 %v1472, %v1889
    %v1985 = vmul.f32 %v1473, %v1899
    %v1986 = vmul.f32 %v1474, %v1909
    %v1987 = vmul.f32 %v1475, %v1919
    %v1988 = vmul.f32 %v1476, %v1929
    %v1989 = vmul.f32 %v1477, %v1939
    %v1990 = vmul.f32 %v1478, %v1949
    %v1991 = vmul.f32 %v1479, %v1959
    %v1992 = vpack.c.bf16 %v1960, %v1960
    %v1993 = vpack.c.bf16 %v1961, %v1961
    %v1994 = vpack.c.bf16 %v1962, %v1962
    %v1995 = vpack.c.bf16 %v1963, %v1963
    %v1996 = vpack.c.bf16 %v1964, %v1964
    %v1997 = vpack.c.bf16 %v1965, %v1965
    %v1998 = vpack.c.bf16 %v1966, %v1966
    %v1999 = vpack.c.bf16 %v1967, %v1967
    %v2000 = vpack.c.bf16 %v1968, %v1968
    %v2001 = vpack.c.bf16 %v1969, %v1969
    %v2002 = vpack.c.bf16 %v1970, %v1970
    %v2003 = vpack.c.bf16 %v1971, %v1971
    %v2004 = vpack.c.bf16 %v1972, %v1972
    %v2005 = vpack.c.bf16 %v1973, %v1973
    %v2006 = vpack.c.bf16 %v1974, %v1974
    %v2007 = vpack.c.bf16 %v1975, %v1975
    %v2008 = vpack.c.bf16 %v1976, %v1976
    %v2009 = vpack.c.bf16 %v1977, %v1977
    %v2010 = vpack.c.bf16 %v1978, %v1978
    %v2011 = vpack.c.bf16 %v1979, %v1979
    %v2012 = vpack.c.bf16 %v1980, %v1980
    %v2013 = vpack.c.bf16 %v1981, %v1981
    %v2014 = vpack.c.bf16 %v1982, %v1982
    %v2015 = vpack.c.bf16 %v1983, %v1983
    %v2016 = vpack.c.bf16 %v1984, %v1984
    %v2017 = vpack.c.bf16 %v1985, %v1985
    %v2018 = vpack.c.bf16 %v1986, %v1986
    %v2019 = vpack.c.bf16 %v1987, %v1987
    %v2020 = vpack.c.bf16 %v1988, %v1988
    %v2021 = vpack.c.bf16 %v1989, %v1989
    %v2022 = vpack.c.bf16 %v1990, %v1990
    %v2023 = vpack.c.bf16 %v1991, %v1991
    %2024 = vst [vmem:[#allocation12] sm:$0xf] %v1992
    %2025 = vst [vmem:[#allocation12 + $0x4] sm:$0xf] %v1993
    %2026 = vst [vmem:[#allocation12 + $0x8] sm:$0xf] %v1994
    %2027 = vst [vmem:[#allocation12 + $0xc] sm:$0xf] %v1995
    %2028 = vst [vmem:[#allocation12 + $0x10] sm:$0xf] %v1996
    %2029 = vst [vmem:[#allocation12 + $0x14] sm:$0xf] %v1997
    %2030 = vst [vmem:[#allocation12 + $0x18] sm:$0xf] %v1998
    %2031 = vst [vmem:[#allocation12 + $0x1c] sm:$0xf] %v1999
    %2032 = vst [vmem:[#allocation12 + $0x20] sm:$0xf] %v2000
    %2033 = vst [vmem:[#allocation12 + $0x24] sm:$0xf] %v2001
    %2034 = vst [vmem:[#allocation12 + $0x28] sm:$0xf] %v2002
    %2035 = vst [vmem:[#allocation12 + $0x2c] sm:$0xf] %v2003
    %2036 = vst [vmem:[#allocation12 + $0x30] sm:$0xf] %v2004
    %2037 = vst [vmem:[#allocation12 + $0x34] sm:$0xf] %v2005
    %2038 = vst [vmem:[#allocation12 + $0x38] sm:$0xf] %v2006
    %2039 = vst [vmem:[#allocation12 + $0x3c] sm:$0xf] %v2007
    %2040 = vst [vmem:[#allocation12 + $0x40] sm:$0xf] %v2008
    %2041 = vst [vmem:[#allocation12 + $0x44] sm:$0xf] %v2009
    %2042 = vst [vmem:[#allocation12 + $0x48] sm:$0xf] %v2010
    %2043 = vst [vmem:[#allocation12 + $0x4c] sm:$0xf] %v2011
    %2044 = vst [vmem:[#allocation12 + $0x50] sm:$0xf] %v2012
    %2045 = vst [vmem:[#allocation12 + $0x54] sm:$0xf] %v2013
    %2046 = vst [vmem:[#allocation12 + $0x58] sm:$0xf] %v2014
    %2047 = vst [vmem:[#allocation12 + $0x5c] sm:$0xf] %v2015
    %2048 = vst [vmem:[#allocation12 + $0x60] sm:$0xf] %v2016
    %2049 = vst [vmem:[#allocation12 + $0x64] sm:$0xf] %v2017
    %2050 = vst [vmem:[#allocation12 + $0x68] sm:$0xf] %v2018
    %2051 = vst [vmem:[#allocation12 + $0x6c] sm:$0xf] %v2019
    %2052 = vst [vmem:[#allocation12 + $0x70] sm:$0xf] %v2020
    %2053 = vst [vmem:[#allocation12 + $0x74] sm:$0xf] %v2021
    %2054 = vst [vmem:[#allocation12 + $0x78] sm:$0xf] %v2022
    %2055 = vst [vmem:[#allocation12 + $0x7c] sm:$0xf] %v2023
    // Predicated region
    $region54: #{tpu_custom_call.1} parent=1 // pred_check
      _
    $region55: #{tpu_custom_call.1} parent=1 // pred_check_branch
      %2057 = sbr.rel (0) target = $region57
    $region56: #{tpu_custom_call.1} parent=1 // pred_region
      %2059 = vsyncadd [#allocation4], 0
      %s2060 = sshll.u32 [#allocation11], 4
      %s2061 = int_to_ptr.vmem [resolvable:$true] %s2060
      %s2062 = sshll.u32 %s8, 4
      %s2063 = int_to_ptr.hbm [resolvable:$true] %s2062
      %2068 = dma.vmem_to_hbm [thread:$0]  %s2061, 4096, %s2063, [#allocation4], 128, 128, 8
    $region57: #{tpu_custom_call.1} parent=1 // pred_fallthru
      _
    // Predicated region
    $region58: #{tpu_custom_call.1} parent=1 // pred_check
      _
    $region59: #{tpu_custom_call.1} parent=1 // pred_check_branch
      %2070 = sbr.rel (0) target = $region61
    $region60: #{tpu_custom_call.1} parent=1 // pred_region
      %2072 = vsyncadd [#allocation13], 0
      %s2073 = sshll.u32 [#allocation12], 4
      %s2074 = int_to_ptr.vmem [resolvable:$true] %s2073
      %s2075 = sshll.u32 %s9, 4
      %s2076 = int_to_ptr.hbm [resolvable:$true] %s2075
      %2081 = dma.vmem_to_hbm [thread:$0]  %s2074, 2048, %s2076, [#allocation13], 64, 64, 4
    $region61: #{tpu_custom_call.1} parent=1 // pred_fallthru
      _
    // Predicated region
    $region62: #{tpu_custom_call.1} parent=1 // pred_check
      _
    $region63: #{tpu_custom_call.1} parent=1 // pred_check_branch
      %2083 = sbr.rel (0) target = $region65
    $region64: #{tpu_custom_call.1} parent=1 // pred_region
      %2085 = dma.done [#allocation4], 4096
    $region65: #{tpu_custom_call.1} parent=1 // pred_fallthru
      _
    // Predicated region
    $region66: #{tpu_custom_call.1} parent=1 // pred_check
      _
    $region67: #{tpu_custom_call.1} parent=1 // pred_check_branch
      %2087 = sbr.rel (0) target = $region69
    $region68: #{tpu_custom_call.1} parent=1 // pred_region
      %2089 = dma.done [#allocation13], 2048
    $region69: #{tpu_custom_call.1} parent=1 // pred_fallthru
      _
    %2090 = vsyncpa [#allocation3], 1
    %2091 = vsyncpa [#allocation6], 1
    %2092 = vsyncpa [#allocation9], 1
    %2093 = vsyncpa [#allocation4], 1
    %2094 = vsyncpa [#allocation13], 1

</llo_original>
